<compile_context>
chip_gen: v6e
topology: v6e:2x2x1
jax: 0.10.0
libtpu: 0.0.40
codegen_flags: <defaults>
</compile_context>

<pallas_src>
import jax
import jax.numpy as jnp
from jax.experimental import pallas as pl
from jax.experimental.pallas import tpu as pltpu


# ----------------------------- static model dims (module defaults) -----------------
C_IN = 7             # channel
KH = 4               # kernel_size[0]  (== input H)
KW = 10              # kernel_size[1]
W_IN = 107           # window_size
NB = 16              # nb_filter
K1 = C_IN * KH       # 28  (im2col depth per tap of conv1)
K1P = 32             # padded to a clean sublane-tile multiple
OW1 = W_IN - KW + 1          # 98
PW1 = OW1 - 2                # 96   MaxPool2d((1,3), stride=(1,1))
OW2 = PW1 - KW + 1           # 87
PW2 = OW2 - 2                # 85
FLAT = NB * PW2              # 1360
HID = 200            # hidden_size
NCLS = 2             # num_classes
NCLS_PAD = 128       # lane-dense padded output width
SP = 128             # per-sample lane pitch in the batch-stacked layout


# ----------------------------- fused Pallas kernel ---------------------------------

def _cnn_fused_kernel(x_ref, w1_ref, s1_ref, sh1_ref,
                      w2_ref, s2_ref, sh2_ref,
                      fc1_w_ref, fc1_b_ref, fc2_w_ref, fc2_b_ref,
                      o_ref):
    bw = x_ref.shape[1]          # lanes in this batch block = nb_blk * SP
    nb_blk = bw // SP            # samples handled by this grid step

    x = x_ref[...]                                                   # (K1P, bw) bf16

    # ----- conv1 (7->16, kernel (4,10)) as ONE matmul over a 10-tap im2col ---------
    # Valid outputs for sample n live in lanes [n*SP, n*SP + OW1); boundary lanes are
    # garbage but finite and never read by later valid-region slices.
    l1 = bw - KW + 1
    im1 = jnp.concatenate([x[:, kw:kw + l1] for kw in range(KW)], axis=0)  # (K1P*KW, l1)
    acc1 = jnp.dot(w1_ref[...], im1, preferred_element_type=jnp.float32)   # (NB, l1) f32
    a1 = jnp.maximum(acc1 * s1_ref[...] + sh1_ref[...], 0.0)               # folded BN + ReLU

    # ----- pool1: width max-pool window 3 stride 1 (shifted maxima) ----------------
    lp1 = l1 - 2
    p1 = jnp.maximum(jnp.maximum(a1[:, 0:lp1], a1[:, 1:lp1 + 1]), a1[:, 2:lp1 + 2])
    p1b = p1.astype(jnp.bfloat16)

    # ----- conv2 (16->16, kernel (1,10)) + BN + ReLU + pool -------------------------
    l2 = lp1 - KW + 1
    im2 = jnp.concatenate([p1b[:, kw:kw + l2] for kw in range(KW)], axis=0)  # (NB*KW, l2)
    acc2 = jnp.dot(w2_ref[...], im2, preferred_element_type=jnp.float32)     # (NB, l2)
    a2 = jnp.maximum(acc2 * s2_ref[...] + sh2_ref[...], 0.0)

    lp2 = l2 - 2
    p2 = jnp.maximum(jnp.maximum(a2[:, 0:lp2], a2[:, 1:lp2 + 1]), a2[:, 2:lp2 + 2])

    # ----- fc1 + ReLU: flatten each sample's (NB, PW2) valid block (PyTorch order
    # c*PW2 + w, lane-aligned per-sample start n*SP) and do ONE batch-shared matmul.
    rows = []
    for n in range(nb_blk):
        base = n * SP
        rows.append(jnp.concatenate(
            [p2[c:c + 1, base:base + PW2] for c in range(NB)], axis=1))      # (1, FLAT)
    flat = jnp.concatenate(rows, axis=0).astype(jnp.bfloat16)                # (nb_blk, FLAT)

    h = jnp.dot(flat, fc1_w_ref[...], preferred_element_type=jnp.float32) + fc1_b_ref[...]
    h = jnp.maximum(h, 0.0).astype(jnp.bfloat16)                             # (nb_blk, HID)

    # ----- fc2 + sigmoid, lane-dense 128-wide output slab ---------------------------
    logits = jnp.dot(h, fc2_w_ref[...], preferred_element_type=jnp.float32) + fc2_b_ref[...]
    sig = jax.nn.sigmoid(logits)                                             # (nb_blk, 128)

    obs = o_ref.shape[0]
    if obs > nb_blk:   # pad rows so the store is a full, unmasked block write
        sig = jnp.concatenate(
            [sig, jnp.zeros((obs - nb_blk, NCLS_PAD), jnp.float32)], axis=0)
    o_ref[...] = sig


# ----------------------------- wrapper ---------------------------------------------

def cnn_forward(x, prep, batch_block=None):
    """x: (N, C_IN, KH, W_IN) float32, prep: output of prepare_params()."""
    n = x.shape[0]
    assert x.shape[1:] == (C_IN, KH, W_IN), x.shape

    if batch_block is None:
        # Single grid step (whole batch) is optimal for tiny batches on v5e/v6e.
        # TODO(synk): on v7x pass batch_block = ceil(n/2) to use both TensorCores.
        batch_block = n
    g = pl.cdiv(n, batch_block)
    n_pad = g * batch_block
    obs = max(8, ((batch_block + 7) // 8) * 8)   # output sublane rows per grid step

    # (N, C, H, W) -> (N, C*H, W), pad rows 28->32 and width 107->128, then stack the
    # batch along lanes: sample i occupies lanes [i*SP, i*SP + W_IN).  Pure layout
    # plumbing done once outside the kernel.
    xf = x.astype(jnp.float32).reshape(n, K1, W_IN)
    xf = jnp.pad(xf, ((0, n_pad - n), (0, K1P - K1), (0, SP - W_IN)))
    x_stk = xf.transpose(1, 0, 2).reshape(K1P, n_pad * SP).astype(jnp.bfloat16)

    args = (x_stk, prep["w1"], prep["s1"], prep["sh1"],
            prep["w2"], prep["s2"], prep["sh2"],
            prep["fc1_w"], prep["fc1_b"], prep["fc2_w"], prep["fc2_b"])

    def const_spec(a):
        # Constant index_map: weight blocks stay resident across batch grid steps.
        return pl.BlockSpec(a.shape, lambda i, _nd=a.ndim: (0,) * _nd)

    in_specs = [pl.BlockSpec((K1P, batch_block * SP), lambda i: (0, i))]
    in_specs += [const_spec(a) for a in args[1:]]

    out = pl.pallas_call(
        _cnn_fused_kernel,
        grid=(g,),
        in_specs=in_specs,
        out_specs=pl.BlockSpec((obs, NCLS_PAD), lambda i: (i, 0)),
        out_shape=jax.ShapeDtypeStruct((g * obs, NCLS_PAD), jnp.float32),
        compiler_params=pltpu.CompilerParams(
            dimension_semantics=("parallel",)),
    )(*args)

    out = out.reshape(g, obs, NCLS_PAD)[:, :batch_block, :NCLS].reshape(n_pad, NCLS)
    return out[:n]


# ----------------------------- parameter prep (done once, outside kernel) ----------

def fold_bn(conv_bias, gamma, beta, running_mean, running_var, eps=1e-5):
    scale = gamma / jnp.sqrt(running_var + eps)
    shift = (conv_bias - running_mean) * scale + beta
    return scale.astype(jnp.float32), shift.astype(jnp.float32)


def prepare_params(p):
    s1, sh1 = fold_bn(p["conv1_b"], p["bn1_gamma"], p["bn1_beta"],
                      p["bn1_mean"], p["bn1_var"])
    s2, sh2 = fold_bn(p["conv2_b"], p["bn2_gamma"], p["bn2_beta"],
                      p["bn2_mean"], p["bn2_var"])

    # conv1_w (NB, C_IN, KH, KW) -> merged-tap (NB, KW*K1P); the row order inside each
    # tap chunk is (ci*KH + kh), matching the in-kernel im2col (rows 28..31 are zero).
    w1 = p["conv1_w"].transpose(3, 1, 2, 0).reshape(KW, K1, NB)
    w1 = jnp.pad(w1, ((0, 0), (0, K1P - K1), (0, 0))).reshape(KW * K1P, NB).T

    # conv2_w (NB, NB, 1, KW) -> merged-tap (NB, KW*NB)
    w2 = p["conv2_w"].transpose(3, 1, 2, 0).reshape(KW * NB, NB).T

    # fc1_w (HID, NB*PW2) with the PyTorch flatten order (c*PW2 + w) -> (FLAT, HID)
    fc1_w = p["fc1_w"].T
    # fc2 padded to a lane-dense 128-wide slab
    fc2_w = jnp.zeros((HID, NCLS_PAD), jnp.float32).at[:, :NCLS].set(p["fc2_w"].T)
    fc2_b = jnp.zeros((1, NCLS_PAD), jnp.float32).at[0, :NCLS].set(p["fc2_b"])

    return {
        "w1": w1.astype(jnp.bfloat16),
        "s1": s1.reshape(NB, 1), "sh1": sh1.reshape(NB, 1),
        "w2": w2.astype(jnp.bfloat16),
        "s2": s2.reshape(NB, 1), "sh2": sh2.reshape(NB, 1),
        "fc1_w": fc1_w.astype(jnp.bfloat16),
        "fc1_b": p["fc1_b"].reshape(1, HID).astype(jnp.float32),
        "fc2_w": fc2_w.astype(jnp.bfloat16),
        "fc2_b": fc2_b,
    }


def init_params(key):
    ks = jax.random.split(key, 6)
    return {
        "conv1_w": 0.05 * jax.random.normal(ks[0], (NB, C_IN, KH, KW), jnp.float32),
        "conv1_b": 0.05 * jax.random.normal(ks[1], (NB,), jnp.float32),
        "bn1_gamma": jnp.ones((NB,), jnp.float32),
        "bn1_beta": jnp.zeros((NB,), jnp.float32),
        "bn1_mean": jnp.zeros((NB,), jnp.float32),
        "bn1_var": jnp.ones((NB,), jnp.float32),
        "conv2_w": 0.05 * jax.random.normal(ks[2], (NB, NB, 1, KW), jnp.float32),
        "conv2_b": 0.05 * jax.random.normal(ks[3], (NB,), jnp.float32),
        "bn2_gamma": jnp.ones((NB,), jnp.float32),
        "bn2_beta": jnp.zeros((NB,), jnp.float32),
        "bn2_mean": jnp.zeros((NB,), jnp.float32),
        "bn2_var": jnp.ones((NB,), jnp.float32),
        "fc1_w": 0.02 * jax.random.normal(ks[4], (HID, FLAT), jnp.float32),
        "fc1_b": jnp.zeros((HID,), jnp.float32),
        "fc2_w": 0.02 * jax.random.normal(ks[5], (NCLS, HID), jnp.float32),
        "fc2_b": jnp.zeros((NCLS,), jnp.float32),
    }


# ----------------------------- pure-JAX reference (correctness check) --------------

def _reference_forward(x, p, eps=1e-5):
    def bn(y, g, b, m, v):
        return (y - m[None, :, None, None]) / jnp.sqrt(v[None, :, None, None] + eps) \
               * g[None, :, None, None] + b[None, :, None, None]

    y = jax.lax.conv_general_dilated(x, p["conv1_w"], (1, 1), "VALID",
                                     dimension_numbers=("NCHW", "OIHW", "NCHW"))
    y = y + p["conv1_b"][None, :, None, None]
    y = jnp.maximum(bn(y, p["bn1_gamma"], p["bn1_beta"], p["bn1_mean"], p["bn1_var"]), 0.0)
    y = jax.lax.reduce_window(y, -jnp.inf, jax.lax.max, (1, 1, 1, 3), (1, 1, 1, 1), "VALID")
    y = jax.lax.conv_general_dilated(y, p["conv2_w"], (1, 1), "VALID",
                                     dimension_numbers=("NCHW", "OIHW", "NCHW"))
    y = y + p["conv2_b"][None, :, None, None]
    y = jnp.maximum(bn(y, p["bn2_gamma"], p["bn2_beta"], p["bn2_mean"], p["bn2_var"]), 0.0)
    y = jax.lax.reduce_window(y, -jnp.inf, jax.lax.max, (1, 1, 1, 3), (1, 1, 1, 1), "VALID")
    flat = y.reshape(y.shape[0], -1)
    h = jnp.maximum(flat @ p["fc1_w"].T + p["fc1_b"], 0.0)
    return jax.nn.sigmoid(h @ p["fc2_w"].T + p["fc2_b"])


if __name__ == "__main__":
    key = jax.random.PRNGKey(0)
    k_x, k_p = jax.random.split(key)

    # Input implied by module defaults: NCHW = (batch=2, channel=7, H=4, W=107)
    x = jax.random.normal(k_x, (2, C_IN, KH, W_IN), dtype=jnp.float32)
    params = init_params(k_p)
    prep = prepare_params(params)

    out = cnn_forward(x, prep)
    out = jax.block_until_ready(out)

    assert out.shape == (2, NCLS), out.shape
    assert bool(jnp.all(jnp.isfinite(out)))
    assert bool(jnp.all((out >= 0.0) & (out <= 1.0)))  # sigmoid range

    ref = _reference_forward(x, params)
    # bf16 matmul operands (f32 accumulation) -> slightly looser tolerance than f32.
    assert bool(jnp.allclose(out, ref, atol=1e-2, rtol=1e-2)), (out, ref)

    print("KERNEL_OK")
</pallas_src>

<mosaic_0001>
module attributes {stable_mosaic.version = 11 : i64} {
  func.func @_cnn_fused_kernel(%arg0: i32, %arg1: memref<32x256xbf16, #tpu.memory_space<vmem>>, %arg2: memref<16x320xbf16, #tpu.memory_space<vmem>>, %arg3: memref<16x1xf32, #tpu.memory_space<vmem>>, %arg4: memref<16x1xf32, #tpu.memory_space<vmem>>, %arg5: memref<16x160xbf16, #tpu.memory_space<vmem>>, %arg6: memref<16x1xf32, #tpu.memory_space<vmem>>, %arg7: memref<16x1xf32, #tpu.memory_space<vmem>>, %arg8: memref<1360x200xbf16, #tpu.memory_space<vmem>>, %arg9: memref<1x200xf32, #tpu.memory_space<vmem>>, %arg10: memref<200x128xbf16, #tpu.memory_space<vmem>>, %arg11: memref<1x128xf32, #tpu.memory_space<vmem>>, %arg12: memref<8x128xf32, #tpu.memory_space<vmem>>) attributes {dimension_semantics = [#tpu.dimension_semantics<parallel>], iteration_bounds = array<i64: 1>, scalar_prefetch = 0 : i64, scratch_operands = 0 : i64, tpu.core_type = #tpu.core_type<tc>, window_params = [{transform_indices = @transform_0, window_bounds = array<i64: 32, 256>}, {pipeline_mode = #tpu.pipeline_mode<synchronous>, transform_indices = @transform_1, window_bounds = array<i64: 16, 320>}, {pipeline_mode = #tpu.pipeline_mode<synchronous>, transform_indices = @transform_2, window_bounds = array<i64: 16, 1>}, {pipeline_mode = #tpu.pipeline_mode<synchronous>, transform_indices = @transform_3, window_bounds = array<i64: 16, 1>}, {pipeline_mode = #tpu.pipeline_mode<synchronous>, transform_indices = @transform_4, window_bounds = array<i64: 16, 160>}, {pipeline_mode = #tpu.pipeline_mode<synchronous>, transform_indices = @transform_5, window_bounds = array<i64: 16, 1>}, {pipeline_mode = #tpu.pipeline_mode<synchronous>, transform_indices = @transform_6, window_bounds = array<i64: 16, 1>}, {pipeline_mode = #tpu.pipeline_mode<synchronous>, transform_indices = @transform_7, window_bounds = array<i64: 1360, 200>}, {pipeline_mode = #tpu.pipeline_mode<synchronous>, transform_indices = @transform_8, window_bounds = array<i64: 1, 200>}, {pipeline_mode = #tpu.pipeline_mode<synchronous>, transform_indices = @transform_9, window_bounds = array<i64: 200, 128>}, {pipeline_mode = #tpu.pipeline_mode<synchronous>, transform_indices = @transform_10, window_bounds = array<i64: 1, 128>}, {transform_indices = @transform_11, window_bounds = array<i64: 8, 128>}]} {
    %c0 = arith.constant 0 : index
    %c0_0 = arith.constant 0 : index
    %0 = vector.load %arg1[%c0, %c0_0] : memref<32x256xbf16, #tpu.memory_space<vmem>>, vector<32x256xbf16>
    %1 = vector.extract_strided_slice %0 {offsets = [0, 0], sizes = [32, 247], strides = [1, 1]} : vector<32x256xbf16> to vector<32x247xbf16>
    %2 = vector.extract_strided_slice %0 {offsets = [0, 1], sizes = [32, 247], strides = [1, 1]} : vector<32x256xbf16> to vector<32x247xbf16>
    %3 = vector.extract_strided_slice %0 {offsets = [0, 2], sizes = [32, 247], strides = [1, 1]} : vector<32x256xbf16> to vector<32x247xbf16>
    %4 = vector.extract_strided_slice %0 {offsets = [0, 3], sizes = [32, 247], strides = [1, 1]} : vector<32x256xbf16> to vector<32x247xbf16>
    %5 = vector.extract_strided_slice %0 {offsets = [0, 4], sizes = [32, 247], strides = [1, 1]} : vector<32x256xbf16> to vector<32x247xbf16>
    %6 = vector.extract_strided_slice %0 {offsets = [0, 5], sizes = [32, 247], strides = [1, 1]} : vector<32x256xbf16> to vector<32x247xbf16>
    %7 = vector.extract_strided_slice %0 {offsets = [0, 6], sizes = [32, 247], strides = [1, 1]} : vector<32x256xbf16> to vector<32x247xbf16>
    %8 = vector.extract_strided_slice %0 {offsets = [0, 7], sizes = [32, 247], strides = [1, 1]} : vector<32x256xbf16> to vector<32x247xbf16>
    %9 = vector.extract_strided_slice %0 {offsets = [0, 8], sizes = [32, 247], strides = [1, 1]} : vector<32x256xbf16> to vector<32x247xbf16>
    %10 = vector.extract_strided_slice %0 {offsets = [0, 9], sizes = [32, 247], strides = [1, 1]} : vector<32x256xbf16> to vector<32x247xbf16>
    %11 = tpu.concatenate %1, %2, %3, %4, %5, %6, %7, %8, %9, %10 in 0 : vector<32x247xbf16>, vector<32x247xbf16>, vector<32x247xbf16>, vector<32x247xbf16>, vector<32x247xbf16>, vector<32x247xbf16>, vector<32x247xbf16>, vector<32x247xbf16>, vector<32x247xbf16>, vector<32x247xbf16> -> vector<320x247xbf16>
    %c0_1 = arith.constant 0 : index
    %c0_2 = arith.constant 0 : index
    %12 = vector.load %arg2[%c0_1, %c0_2] : memref<16x320xbf16, #tpu.memory_space<vmem>>, vector<16x320xbf16>
    %cst = arith.constant dense<0.000000e+00> : vector<16x247xf32>
    %13 = tpu.matmul %12, %11, %cst {dimension_numbers = #tpu.dot_dimension_numbers<[1], [0], [0], [1], [0, 0, 1, 1], [], []>} : vector<16x320xbf16>, vector<320x247xbf16>, vector<16x247xf32> -> vector<16x247xf32>
    %c0_3 = arith.constant 0 : index
    %c0_4 = arith.constant 0 : index
    %14 = vector.load %arg3[%c0_3, %c0_4] : memref<16x1xf32, #tpu.memory_space<vmem>>, vector<16x1xf32>
    %15 = vector.broadcast %14 : vector<16x1xf32> to vector<16x247xf32>
    %16 = arith.mulf %13, %15 : vector<16x247xf32>
    %c0_5 = arith.constant 0 : index
    %c0_6 = arith.constant 0 : index
    %17 = vector.load %arg4[%c0_5, %c0_6] : memref<16x1xf32, #tpu.memory_space<vmem>>, vector<16x1xf32>
    %18 = vector.broadcast %17 : vector<16x1xf32> to vector<16x247xf32>
    %19 = arith.addf %16, %18 : vector<16x247xf32>
    %cst_7 = arith.constant 0.000000e+00 : f32
    %20 = vector.broadcast %cst_7 : f32 to vector<16x247xf32>
    %21 = arith.maximumf %19, %20 : vector<16x247xf32>
    %22 = vector.extract_strided_slice %21 {offsets = [0, 0], sizes = [16, 245], strides = [1, 1]} : vector<16x247xf32> to vector<16x245xf32>
    %23 = vector.extract_strided_slice %21 {offsets = [0, 1], sizes = [16, 245], strides = [1, 1]} : vector<16x247xf32> to vector<16x245xf32>
    %24 = arith.maximumf %22, %23 : vector<16x245xf32>
    %25 = vector.extract_strided_slice %21 {offsets = [0, 2], sizes = [16, 245], strides = [1, 1]} : vector<16x247xf32> to vector<16x245xf32>
    %26 = arith.maximumf %24, %25 : vector<16x245xf32>
    %27 = arith.truncf %26 : vector<16x245xf32> to vector<16x245xbf16>
    %28 = vector.extract_strided_slice %27 {offsets = [0, 0], sizes = [16, 236], strides = [1, 1]} : vector<16x245xbf16> to vector<16x236xbf16>
    %29 = vector.extract_strided_slice %27 {offsets = [0, 1], sizes = [16, 236], strides = [1, 1]} : vector<16x245xbf16> to vector<16x236xbf16>
    %30 = vector.extract_strided_slice %27 {offsets = [0, 2], sizes = [16, 236], strides = [1, 1]} : vector<16x245xbf16> to vector<16x236xbf16>
    %31 = vector.extract_strided_slice %27 {offsets = [0, 3], sizes = [16, 236], strides = [1, 1]} : vector<16x245xbf16> to vector<16x236xbf16>
    %32 = vector.extract_strided_slice %27 {offsets = [0, 4], sizes = [16, 236], strides = [1, 1]} : vector<16x245xbf16> to vector<16x236xbf16>
    %33 = vector.extract_strided_slice %27 {offsets = [0, 5], sizes = [16, 236], strides = [1, 1]} : vector<16x245xbf16> to vector<16x236xbf16>
    %34 = vector.extract_strided_slice %27 {offsets = [0, 6], sizes = [16, 236], strides = [1, 1]} : vector<16x245xbf16> to vector<16x236xbf16>
    %35 = vector.extract_strided_slice %27 {offsets = [0, 7], sizes = [16, 236], strides = [1, 1]} : vector<16x245xbf16> to vector<16x236xbf16>
    %36 = vector.extract_strided_slice %27 {offsets = [0, 8], sizes = [16, 236], strides = [1, 1]} : vector<16x245xbf16> to vector<16x236xbf16>
    %37 = vector.extract_strided_slice %27 {offsets = [0, 9], sizes = [16, 236], strides = [1, 1]} : vector<16x245xbf16> to vector<16x236xbf16>
    %38 = tpu.concatenate %28, %29, %30, %31, %32, %33, %34, %35, %36, %37 in 0 : vector<16x236xbf16>, vector<16x236xbf16>, vector<16x236xbf16>, vector<16x236xbf16>, vector<16x236xbf16>, vector<16x236xbf16>, vector<16x236xbf16>, vector<16x236xbf16>, vector<16x236xbf16>, vector<16x236xbf16> -> vector<160x236xbf16>
    %c0_8 = arith.constant 0 : index
    %c0_9 = arith.constant 0 : index
    %39 = vector.load %arg5[%c0_8, %c0_9] : memref<16x160xbf16, #tpu.memory_space<vmem>>, vector<16x160xbf16>
    %cst_10 = arith.constant dense<0.000000e+00> : vector<16x236xf32>
    %40 = tpu.matmul %39, %38, %cst_10 {dimension_numbers = #tpu.dot_dimension_numbers<[1], [0], [0], [1], [0, 0, 1, 1], [], []>} : vector<16x160xbf16>, vector<160x236xbf16>, vector<16x236xf32> -> vector<16x236xf32>
    %c0_11 = arith.constant 0 : index
    %c0_12 = arith.constant 0 : index
    %41 = vector.load %arg6[%c0_11, %c0_12] : memref<16x1xf32, #tpu.memory_space<vmem>>, vector<16x1xf32>
    %42 = vector.broadcast %41 : vector<16x1xf32> to vector<16x236xf32>
    %43 = arith.mulf %40, %42 : vector<16x236xf32>
    %c0_13 = arith.constant 0 : index
    %c0_14 = arith.constant 0 : index
    %44 = vector.load %arg7[%c0_13, %c0_14] : memref<16x1xf32, #tpu.memory_space<vmem>>, vector<16x1xf32>
    %45 = vector.broadcast %44 : vector<16x1xf32> to vector<16x236xf32>
    %46 = arith.addf %43, %45 : vector<16x236xf32>
    %cst_15 = arith.constant 0.000000e+00 : f32
    %47 = vector.broadcast %cst_15 : f32 to vector<16x236xf32>
    %48 = arith.maximumf %46, %47 : vector<16x236xf32>
    %49 = vector.extract_strided_slice %48 {offsets = [0, 0], sizes = [16, 234], strides = [1, 1]} : vector<16x236xf32> to vector<16x234xf32>
    %50 = vector.extract_strided_slice %48 {offsets = [0, 1], sizes = [16, 234], strides = [1, 1]} : vector<16x236xf32> to vector<16x234xf32>
    %51 = arith.maximumf %49, %50 : vector<16x234xf32>
    %52 = vector.extract_strided_slice %48 {offsets = [0, 2], sizes = [16, 234], strides = [1, 1]} : vector<16x236xf32> to vector<16x234xf32>
    %53 = arith.maximumf %51, %52 : vector<16x234xf32>
    %54 = vector.extract_strided_slice %53 {offsets = [0, 0], sizes = [1, 85], strides = [1, 1]} : vector<16x234xf32> to vector<1x85xf32>
    %55 = vector.extract_strided_slice %53 {offsets = [1, 0], sizes = [1, 85], strides = [1, 1]} : vector<16x234xf32> to vector<1x85xf32>
    %56 = vector.extract_strided_slice %53 {offsets = [2, 0], sizes = [1, 85], strides = [1, 1]} : vector<16x234xf32> to vector<1x85xf32>
    %57 = vector.extract_strided_slice %53 {offsets = [3, 0], sizes = [1, 85], strides = [1, 1]} : vector<16x234xf32> to vector<1x85xf32>
    %58 = vector.extract_strided_slice %53 {offsets = [4, 0], sizes = [1, 85], strides = [1, 1]} : vector<16x234xf32> to vector<1x85xf32>
    %59 = vector.extract_strided_slice %53 {offsets = [5, 0], sizes = [1, 85], strides = [1, 1]} : vector<16x234xf32> to vector<1x85xf32>
    %60 = vector.extract_strided_slice %53 {offsets = [6, 0], sizes = [1, 85], strides = [1, 1]} : vector<16x234xf32> to vector<1x85xf32>
    %61 = vector.extract_strided_slice %53 {offsets = [7, 0], sizes = [1, 85], strides = [1, 1]} : vector<16x234xf32> to vector<1x85xf32>
    %62 = vector.extract_strided_slice %53 {offsets = [8, 0], sizes = [1, 85], strides = [1, 1]} : vector<16x234xf32> to vector<1x85xf32>
    %63 = vector.extract_strided_slice %53 {offsets = [9, 0], sizes = [1, 85], strides = [1, 1]} : vector<16x234xf32> to vector<1x85xf32>
    %64 = vector.extract_strided_slice %53 {offsets = [10, 0], sizes = [1, 85], strides = [1, 1]} : vector<16x234xf32> to vector<1x85xf32>
    %65 = vector.extract_strided_slice %53 {offsets = [11, 0], sizes = [1, 85], strides = [1, 1]} : vector<16x234xf32> to vector<1x85xf32>
    %66 = vector.extract_strided_slice %53 {offsets = [12, 0], sizes = [1, 85], strides = [1, 1]} : vector<16x234xf32> to vector<1x85xf32>
    %67 = vector.extract_strided_slice %53 {offsets = [13, 0], sizes = [1, 85], strides = [1, 1]} : vector<16x234xf32> to vector<1x85xf32>
    %68 = vector.extract_strided_slice %53 {offsets = [14, 0], sizes = [1, 85], strides = [1, 1]} : vector<16x234xf32> to vector<1x85xf32>
    %69 = vector.extract_strided_slice %53 {offsets = [15, 0], sizes = [1, 85], strides = [1, 1]} : vector<16x234xf32> to vector<1x85xf32>
    %70 = tpu.concatenate %54, %55, %56, %57, %58, %59, %60, %61, %62, %63, %64, %65, %66, %67, %68, %69 in 1 : vector<1x85xf32>, vector<1x85xf32>, vector<1x85xf32>, vector<1x85xf32>, vector<1x85xf32>, vector<1x85xf32>, vector<1x85xf32>, vector<1x85xf32>, vector<1x85xf32>, vector<1x85xf32>, vector<1x85xf32>, vector<1x85xf32>, vector<1x85xf32>, vector<1x85xf32>, vector<1x85xf32>, vector<1x85xf32> -> vector<1x1360xf32>
    %71 = vector.extract_strided_slice %53 {offsets = [0, 128], sizes = [1, 85], strides = [1, 1]} : vector<16x234xf32> to vector<1x85xf32>
    %72 = vector.extract_strided_slice %53 {offsets = [1, 128], sizes = [1, 85], strides = [1, 1]} : vector<16x234xf32> to vector<1x85xf32>
    %73 = vector.extract_strided_slice %53 {offsets = [2, 128], sizes = [1, 85], strides = [1, 1]} : vector<16x234xf32> to vector<1x85xf32>
    %74 = vector.extract_strided_slice %53 {offsets = [3, 128], sizes = [1, 85], strides = [1, 1]} : vector<16x234xf32> to vector<1x85xf32>
    %75 = vector.extract_strided_slice %53 {offsets = [4, 128], sizes = [1, 85], strides = [1, 1]} : vector<16x234xf32> to vector<1x85xf32>
    %76 = vector.extract_strided_slice %53 {offsets = [5, 128], sizes = [1, 85], strides = [1, 1]} : vector<16x234xf32> to vector<1x85xf32>
    %77 = vector.extract_strided_slice %53 {offsets = [6, 128], sizes = [1, 85], strides = [1, 1]} : vector<16x234xf32> to vector<1x85xf32>
    %78 = vector.extract_strided_slice %53 {offsets = [7, 128], sizes = [1, 85], strides = [1, 1]} : vector<16x234xf32> to vector<1x85xf32>
    %79 = vector.extract_strided_slice %53 {offsets = [8, 128], sizes = [1, 85], strides = [1, 1]} : vector<16x234xf32> to vector<1x85xf32>
    %80 = vector.extract_strided_slice %53 {offsets = [9, 128], sizes = [1, 85], strides = [1, 1]} : vector<16x234xf32> to vector<1x85xf32>
    %81 = vector.extract_strided_slice %53 {offsets = [10, 128], sizes = [1, 85], strides = [1, 1]} : vector<16x234xf32> to vector<1x85xf32>
    %82 = vector.extract_strided_slice %53 {offsets = [11, 128], sizes = [1, 85], strides = [1, 1]} : vector<16x234xf32> to vector<1x85xf32>
    %83 = vector.extract_strided_slice %53 {offsets = [12, 128], sizes = [1, 85], strides = [1, 1]} : vector<16x234xf32> to vector<1x85xf32>
    %84 = vector.extract_strided_slice %53 {offsets = [13, 128], sizes = [1, 85], strides = [1, 1]} : vector<16x234xf32> to vector<1x85xf32>
    %85 = vector.extract_strided_slice %53 {offsets = [14, 128], sizes = [1, 85], strides = [1, 1]} : vector<16x234xf32> to vector<1x85xf32>
    %86 = vector.extract_strided_slice %53 {offsets = [15, 128], sizes = [1, 85], strides = [1, 1]} : vector<16x234xf32> to vector<1x85xf32>
    %87 = tpu.concatenate %71, %72, %73, %74, %75, %76, %77, %78, %79, %80, %81, %82, %83, %84, %85, %86 in 1 : vector<1x85xf32>, vector<1x85xf32>, vector<1x85xf32>, vector<1x85xf32>, vector<1x85xf32>, vector<1x85xf32>, vector<1x85xf32>, vector<1x85xf32>, vector<1x85xf32>, vector<1x85xf32>, vector<1x85xf32>, vector<1x85xf32>, vector<1x85xf32>, vector<1x85xf32>, vector<1x85xf32>, vector<1x85xf32> -> vector<1x1360xf32>
    %88 = tpu.concatenate %70, %87 in 0 : vector<1x1360xf32>, vector<1x1360xf32> -> vector<2x1360xf32>
    %89 = arith.truncf %88 : vector<2x1360xf32> to vector<2x1360xbf16>
    %c0_16 = arith.constant 0 : index
    %c0_17 = arith.constant 0 : index
    %90 = vector.load %arg8[%c0_16, %c0_17] : memref<1360x200xbf16, #tpu.memory_space<vmem>>, vector<1360x200xbf16>
    %cst_18 = arith.constant dense<0.000000e+00> : vector<2x200xf32>
    %91 = tpu.matmul %89, %90, %cst_18 {dimension_numbers = #tpu.dot_dimension_numbers<[1], [0], [0], [1], [0, 0, 1, 1], [], []>} : vector<2x1360xbf16>, vector<1360x200xbf16>, vector<2x200xf32> -> vector<2x200xf32>
    %c0_19 = arith.constant 0 : index
    %c0_20 = arith.constant 0 : index
    %92 = vector.load %arg9[%c0_19, %c0_20] : memref<1x200xf32, #tpu.memory_space<vmem>>, vector<1x200xf32>
    %93 = vector.broadcast %92 : vector<1x200xf32> to vector<2x200xf32>
    %94 = arith.addf %91, %93 : vector<2x200xf32>
    %cst_21 = arith.constant 0.000000e+00 : f32
    %95 = vector.broadcast %cst_21 : f32 to vector<2x200xf32>
    %96 = arith.maximumf %94, %95 : vector<2x200xf32>
    %97 = arith.truncf %96 : vector<2x200xf32> to vector<2x200xbf16>
    %c0_22 = arith.constant 0 : index
    %c0_23 = arith.constant 0 : index
    %98 = vector.load %arg10[%c0_22, %c0_23] : memref<200x128xbf16, #tpu.memory_space<vmem>>, vector<200x128xbf16>
    %cst_24 = arith.constant dense<0.000000e+00> : vector<2x128xf32>
    %99 = tpu.matmul %97, %98, %cst_24 {dimension_numbers = #tpu.dot_dimension_numbers<[1], [0], [0], [1], [0, 0, 1, 1], [], []>} : vector<2x200xbf16>, vector<200x128xbf16>, vector<2x128xf32> -> vector<2x128xf32>
    %c0_25 = arith.constant 0 : index
    %c0_26 = arith.constant 0 : index
    %100 = vector.load %arg11[%c0_25, %c0_26] : memref<1x128xf32, #tpu.memory_space<vmem>>, vector<1x128xf32>
    %101 = vector.broadcast %100 : vector<1x128xf32> to vector<2x128xf32>
    %102 = arith.addf %99, %101 : vector<2x128xf32>
    %103 = arith.negf %102 : vector<2x128xf32>
    %104 = math.exp %103 : vector<2x128xf32>
    %cst_27 = arith.constant 1.000000e+00 : f32
    %105 = vector.broadcast %cst_27 : f32 to vector<2x128xf32>
    %106 = arith.addf %105, %104 : vector<2x128xf32>
    %107 = arith.divf %105, %106 : vector<2x128xf32>
    %cst_28 = arith.constant 0.000000e+00 : f32
    %108 = vector.broadcast %cst_28 : f32 to vector<6x128xf32>
    %109 = tpu.concatenate %107, %108 in 0 : vector<2x128xf32>, vector<6x128xf32> -> vector<8x128xf32>
    %c0_29 = arith.constant 0 : index
    %c0_30 = arith.constant 0 : index
    %110 = vector.load %arg12[%c0_29, %c0_30] : memref<8x128xf32, #tpu.memory_space<vmem>>, vector<8x128xf32>
    tpu.vector_store %arg12[%c0_29, %c0_30], %109 {strides = array<i32>} : memref<8x128xf32, #tpu.memory_space<vmem>>, vector<8x128xf32>,
    return
  }
  func.func @transform_0(%arg0: i32) -> (i32, i32) {
    %c0_i32 = arith.constant 0 : i32
    %c0_i32_0 = arith.constant 0 : i32
    return %c0_i32, %arg0 : i32, i32
  }
  func.func @transform_1(%arg0: i32) -> (i32, i32) {
    %c0_i32 = arith.constant 0 : i32
    %c0_i32_0 = arith.constant 0 : i32
    %c0_i32_1 = arith.constant 0 : i32
    return %c0_i32, %c0_i32_0 : i32, i32
  }
  func.func @transform_2(%arg0: i32) -> (i32, i32) {
    %c0_i32 = arith.constant 0 : i32
    %c0_i32_0 = arith.constant 0 : i32
    %c0_i32_1 = arith.constant 0 : i32
    return %c0_i32, %c0_i32_0 : i32, i32
  }
  func.func @transform_3(%arg0: i32) -> (i32, i32) {
    %c0_i32 = arith.constant 0 : i32
    %c0_i32_0 = arith.constant 0 : i32
    %c0_i32_1 = arith.constant 0 : i32
    return %c0_i32, %c0_i32_0 : i32, i32
  }
  func.func @transform_4(%arg0: i32) -> (i32, i32) {
    %c0_i32 = arith.constant 0 : i32
    %c0_i32_0 = arith.constant 0 : i32
    %c0_i32_1 = arith.constant 0 : i32
    return %c0_i32, %c0_i32_0 : i32, i32
  }
  func.func @transform_5(%arg0: i32) -> (i32, i32) {
    %c0_i32 = arith.constant 0 : i32
    %c0_i32_0 = arith.constant 0 : i32
    %c0_i32_1 = arith.constant 0 : i32
    return %c0_i32, %c0_i32_0 : i32, i32
  }
  func.func @transform_6(%arg0: i32) -> (i32, i32) {
    %c0_i32 = arith.constant 0 : i32
    %c0_i32_0 = arith.constant 0 : i32
    %c0_i32_1 = arith.constant 0 : i32
    return %c0_i32, %c0_i32_0 : i32, i32
  }
  func.func @transform_7(%arg0: i32) -> (i32, i32) {
    %c0_i32 = arith.constant 0 : i32
    %c0_i32_0 = arith.constant 0 : i32
    %c0_i32_1 = arith.constant 0 : i32
    return %c0_i32, %c0_i32_0 : i32, i32
  }
  func.func @transform_8(%arg0: i32) -> (i32, i32) {
    %c0_i32 = arith.constant 0 : i32
    %c0_i32_0 = arith.constant 0 : i32
    %c0_i32_1 = arith.constant 0 : i32
    return %c0_i32, %c0_i32_0 : i32, i32
  }
  func.func @transform_9(%arg0: i32) -> (i32, i32) {
    %c0_i32 = arith.constant 0 : i32
    %c0_i32_0 = arith.constant 0 : i32
    %c0_i32_1 = arith.constant 0 : i32
    return %c0_i32, %c0_i32_0 : i32, i32
  }
  func.func @transform_10(%arg0: i32) -> (i32, i32) {
    %c0_i32 = arith.constant 0 : i32
    %c0_i32_0 = arith.constant 0 : i32
    %c0_i32_1 = arith.constant 0 : i32
    return %c0_i32, %c0_i32_0 : i32, i32
  }
  func.func @transform_11(%arg0: i32) -> (i32, i32) {
    %c0_i32 = arith.constant 0 : i32
    %c0_i32_0 = arith.constant 0 : i32
    return %arg0, %c0_i32 : i32, i32
  }
}

</mosaic_0001>

<llo_original>
// kernel: tpu_custom_call.1
$region0: #{tpu_custom_call.1}
  #allocation0 [shape = 'u32[]', space=smem, size = 0x4, offset = 0x4, fixed_abs, tag = 'smem constant byte address 0x4 - core index']
  #allocation1 [shape = 'u32[144,128]{1,0:T(1,128)}', space=vmem, size = 0x12000, scoped, tag = 'internal scratch']
  %s0 = inlined_call_operand.vmem [shape: bf16[32,256], index: 0, kind: input, shape index: {}]
  %s1 = inlined_call_operand.vmem [shape: bf16[16,320], index: 1, kind: input, shape index: {}]
  %s2 = inlined_call_operand.vmem [shape: f32[16,1], index: 2, kind: input, shape index: {}]
  %s3 = inlined_call_operand.vmem [shape: f32[16,1], index: 3, kind: input, shape index: {}]
  %s4 = inlined_call_operand.vmem [shape: bf16[16,160], index: 4, kind: input, shape index: {}]
  %s5 = inlined_call_operand.vmem [shape: f32[16,1], index: 5, kind: input, shape index: {}]
  %s6 = inlined_call_operand.vmem [shape: f32[16,1], index: 6, kind: input, shape index: {}]
  %s7 = inlined_call_operand.vmem [shape: bf16[1360,200], index: 7, kind: input, shape index: {}]
  %s8 = inlined_call_operand.vmem [shape: f32[1,200], index: 8, kind: input, shape index: {}]
  %s9 = inlined_call_operand.vmem [shape: bf16[200,128], index: 9, kind: input, shape index: {}]
  %s10 = inlined_call_operand.vmem [shape: f32[1,128], index: 10, kind: input, shape index: {}]
  %s11 = inlined_call_operand.hbm [shape: f32[8,128], index: 11, kind: output, shape index: {}]
  %s12 = sld [smem:[#allocation0]]
  $region54: #{tpu_custom_call.1} parent=0
    _
  %s14 = ssub.s32 1, %s12
  %s15 = scalar_select 0, %s14, %s12
  $region1: #{tpu_custom_call.1} parent=0
    #allocation2 [shape = 'u8[4096]{0}', space=vmem, size = 0x1000, scoped, tag = 'output window, operand 0, single buffered']
    #allocation3 [shape = 's32[1]{0}', space=sflag, size = 0x4, scoped, tag = 'scoped memory for tpu_custom_call.1']
    %16 = vsyncpa [#allocation3], 0
    // Predicated region
    $region2: #{tpu_custom_call.1} parent=1 // pred_check
      _
    $region3: #{tpu_custom_call.1} parent=1 // pred_check_branch
      %18 = sbr.rel (0) target = $region5
    $region4: #{tpu_custom_call.1} parent=1 // pred_region
      _
    $region5: #{tpu_custom_call.1} parent=1 // pred_fallthru
      _
    // Predicated region
    $region6: #{tpu_custom_call.1} parent=1 // pred_check
      _
    $region7: #{tpu_custom_call.1} parent=1 // pred_check_branch
      %20 = sbr.rel (0) target = $region9
    $region8: #{tpu_custom_call.1} parent=1 // pred_region
      _
    $region9: #{tpu_custom_call.1} parent=1 // pred_fallthru
      _
    // Predicated region
    $region10: #{tpu_custom_call.1} parent=1 // pred_check
      _
    $region11: #{tpu_custom_call.1} parent=1 // pred_check_branch
      %22 = sbr.rel (0) target = $region13
    $region12: #{tpu_custom_call.1} parent=1 // pred_region
      _
    $region13: #{tpu_custom_call.1} parent=1 // pred_fallthru
      _
    // Predicated region
    $region14: #{tpu_custom_call.1} parent=1 // pred_check
      _
    $region15: #{tpu_custom_call.1} parent=1 // pred_check_branch
      %24 = sbr.rel (0) target = $region17
    $region16: #{tpu_custom_call.1} parent=1 // pred_region
      _
    $region17: #{tpu_custom_call.1} parent=1 // pred_fallthru
      _
    // Predicated region
    $region18: #{tpu_custom_call.1} parent=1 // pred_check
      _
    $region19: #{tpu_custom_call.1} parent=1 // pred_check_branch
      %26 = sbr.rel (0) target = $region21
    $region20: #{tpu_custom_call.1} parent=1 // pred_region
      _
    $region21: #{tpu_custom_call.1} parent=1 // pred_fallthru
      _
    // Predicated region
    $region22: #{tpu_custom_call.1} parent=1 // pred_check
      _
    $region23: #{tpu_custom_call.1} parent=1 // pred_check_branch
      %28 = sbr.rel (0) target = $region25
    $region24: #{tpu_custom_call.1} parent=1 // pred_region
      _
    $region25: #{tpu_custom_call.1} parent=1 // pred_fallthru
      _
    // Predicated region
    $region26: #{tpu_custom_call.1} parent=1 // pred_check
      _
    $region27: #{tpu_custom_call.1} parent=1 // pred_check_branch
      %30 = sbr.rel (0) target = $region29
    $region28: #{tpu_custom_call.1} parent=1 // pred_region
      _
    $region29: #{tpu_custom_call.1} parent=1 // pred_fallthru
      _
    // Predicated region
    $region30: #{tpu_custom_call.1} parent=1 // pred_check
      _
    $region31: #{tpu_custom_call.1} parent=1 // pred_check_branch
      %32 = sbr.rel (0) target = $region33
    $region32: #{tpu_custom_call.1} parent=1 // pred_region
      _
    $region33: #{tpu_custom_call.1} parent=1 // pred_fallthru
      _
    // Predicated region
    $region34: #{tpu_custom_call.1} parent=1 // pred_check
      _
    $region35: #{tpu_custom_call.1} parent=1 // pred_check_branch
      %34 = sbr.rel (0) target = $region37
    $region36: #{tpu_custom_call.1} parent=1 // pred_region
      _
    $region37: #{tpu_custom_call.1} parent=1 // pred_fallthru
      _
    // Predicated region
    $region38: #{tpu_custom_call.1} parent=1 // pred_check
      _
    $region39: #{tpu_custom_call.1} parent=1 // pred_check_branch
      %36 = sbr.rel (0) target = $region41
    $region40: #{tpu_custom_call.1} parent=1 // pred_region
      _
    $region41: #{tpu_custom_call.1} parent=1 // pred_fallthru
      _
    // Predicated region
    $region42: #{tpu_custom_call.1} parent=1 // pred_check
      _
    $region43: #{tpu_custom_call.1} parent=1 // pred_check_branch
      %38 = sbr.rel (0) target = $region45
    $region44: #{tpu_custom_call.1} parent=1 // pred_region
      _
    $region45: #{tpu_custom_call.1} parent=1 // pred_fallthru
      _
    %v40 = vld [vmem:[%s0] sm:$0xff]
    %v41 = vld [vmem:[%s0 + $0x8] sm:$0xff]
    %v42 = vld [vmem:[%s0 + $0x10] sm:$0xff]
    %v43 = vld [vmem:[%s0 + $0x18] sm:$0xff]
    %v48 = vunpack.c.l.b16 %v40
    %v49 = vunpack.c.h.b16 %v40
    %v50 = vunpack.c.l.b16 %v41
    %v51 = vunpack.c.h.b16 %v41
    %v52 = vunpack.c.l.b16 %v42
    %v53 = vunpack.c.h.b16 %v42
    %v54 = vunpack.c.l.b16 %v43
    %v55 = vunpack.c.h.b16 %v43
    %v56 = vpack.c.b16 %v50, %v48
    %v57 = vpack.c.b16 %v51, %v49
    %v58 = vpack.c.b16 %v54, %v52
    %v59 = vpack.c.b16 %v55, %v53
    %64 = vrot.lane.b32.xlu0 %v56, 127
    %v65 = vpop.permute.xlu0 %64
    %66 = vrot.lane.b32.xlu0 %v57, 127
    %v67 = vpop.permute.xlu0 %66
    %68 = vrot.lane.b32.xlu0 %v58, 127
    %v69 = vpop.permute.xlu0 %68
    %70 = vrot.lane.b32.xlu0 %v59, 127
    %v71 = vpop.permute.xlu0 %70
    %vm72 = vcmask 1039360
    %v73 = vsel %vm72, %v65, %v67
    %v74 = vsel %vm72, %v69, %v71
    %79 = vrot.lane.b32.xlu0 %v56, 126
    %v80 = vpop.permute.xlu0 %79
    %81 = vrot.lane.b32.xlu0 %v57, 126
    %v82 = vpop.permute.xlu0 %81
    %83 = vrot.lane.b32.xlu0 %v58, 126
    %v84 = vpop.permute.xlu0 %83
    %85 = vrot.lane.b32.xlu0 %v59, 126
    %v86 = vpop.permute.xlu0 %85
    %vm87 = vcmask 1031168
    %v88 = vsel %vm87, %v80, %v82
    %v89 = vsel %vm87, %v84, %v86
    %94 = vrot.lane.b32.xlu0 %v56, 125
    %v95 = vpop.permute.xlu0 %94
    %96 = vrot.lane.b32.xlu0 %v57, 125
    %v97 = vpop.permute.xlu0 %96
    %98 = vrot.lane.b32.xlu0 %v58, 125
    %v99 = vpop.permute.xlu0 %98
    %100 = vrot.lane.b32.xlu0 %v59, 125
    %v101 = vpop.permute.xlu0 %100
    %vm102 = vcmask 1022976
    %v103 = vsel %vm102, %v95, %v97
    %v104 = vsel %vm102, %v99, %v101
    %109 = vrot.lane.b32.xlu0 %v56, 124
    %v110 = vpop.permute.xlu0 %109
    %111 = vrot.lane.b32.xlu0 %v57, 124
    %v112 = vpop.permute.xlu0 %111
    %113 = vrot.lane.b32.xlu0 %v58, 124
    %v114 = vpop.permute.xlu0 %113
    %115 = vrot.lane.b32.xlu0 %v59, 124
    %v116 = vpop.permute.xlu0 %115
    %vm117 = vcmask 1014784
    %v118 = vsel %vm117, %v110, %v112
    %v119 = vsel %vm117, %v114, %v116
    %124 = vrot.lane.b32.xlu0 %v56, 123
    %v125 = vpop.permute.xlu0 %124
    %126 = vrot.lane.b32.xlu0 %v57, 123
    %v127 = vpop.permute.xlu0 %126
    %128 = vrot.lane.b32.xlu0 %v58, 123
    %v129 = vpop.permute.xlu0 %128
    %130 = vrot.lane.b32.xlu0 %v59, 123
    %v131 = vpop.permute.xlu0 %130
    %vm132 = vcmask 1006592
    %v133 = vsel %vm132, %v125, %v127
    %v134 = vsel %vm132, %v129, %v131
    %139 = vrot.lane.b32.xlu0 %v56, 122
    %v140 = vpop.permute.xlu0 %139
    %141 = vrot.lane.b32.xlu0 %v57, 122
    %v142 = vpop.permute.xlu0 %141
    %143 = vrot.lane.b32.xlu0 %v58, 122
    %v144 = vpop.permute.xlu0 %143
    %145 = vrot.lane.b32.xlu0 %v59, 122
    %v146 = vpop.permute.xlu0 %145
    %vm147 = vcmask 998400
    %v148 = vsel %vm147, %v140, %v142
    %v149 = vsel %vm147, %v144, %v146
    %154 = vrot.lane.b32.xlu0 %v56, 121
    %v155 = vpop.permute.xlu0 %154
    %156 = vrot.lane.b32.xlu0 %v57, 121
    %v157 = vpop.permute.xlu0 %156
    %158 = vrot.lane.b32.xlu0 %v58, 121
    %v159 = vpop.permute.xlu0 %158
    %160 = vrot.lane.b32.xlu0 %v59, 121
    %v161 = vpop.permute.xlu0 %160
    %vm162 = vcmask 990208
    %v163 = vsel %vm162, %v155, %v157
    %v164 = vsel %vm162, %v159, %v161
    %169 = vrot.lane.b32.xlu0 %v56, 120
    %v170 = vpop.permute.xlu0 %169
    %171 = vrot.lane.b32.xlu0 %v57, 120
    %v172 = vpop.permute.xlu0 %171
    %173 = vrot.lane.b32.xlu0 %v58, 120
    %v174 = vpop.permute.xlu0 %173
    %175 = vrot.lane.b32.xlu0 %v59, 120
    %v176 = vpop.permute.xlu0 %175
    %vm177 = vcmask 982016
    %v178 = vsel %vm177, %v170, %v172
    %v179 = vsel %vm177, %v174, %v176
    %184 = vrot.lane.b32.xlu0 %v56, 119
    %v185 = vpop.permute.xlu0 %184
    %186 = vrot.lane.b32.xlu0 %v57, 119
    %v187 = vpop.permute.xlu0 %186
    %188 = vrot.lane.b32.xlu0 %v58, 119
    %v189 = vpop.permute.xlu0 %188
    %190 = vrot.lane.b32.xlu0 %v59, 119
    %v191 = vpop.permute.xlu0 %190
    %vm192 = vcmask 973824
    %v193 = vsel %vm192, %v185, %v187
    %v194 = vsel %vm192, %v189, %v191
    %v199 = vld [vmem:[%s1] sm:$0xff]
    %v200 = vld [vmem:[%s1 + $0x8] sm:$0xf]
    %v201 = vld [vmem:[%s1 + $0xc] sm:$0xff]
    %v202 = vld [vmem:[%s1 + $0x14] sm:$0xf]
    %v207 = vunpack.c.l.b16 %v199
    %v208 = vunpack.c.h.b16 %v199
    %v209 = vunpack.c.l.b16 %v200
    %v210 = vunpack.c.l.b16 %v201
    %v211 = vunpack.c.h.b16 %v201
    %v212 = vunpack.c.l.b16 %v202
    %v213 = vpack.c.b16 %v210, %v207
    %v214 = vpack.c.b16 %v211, %v208
    %v215 = vpack.c.b16 %v212, %v209
    %vm218 = vcmask 523264
    %v220 = vsel %vm218, %v215, 0
    %222 = vmatprep.subr.bf16.mxu0 %v101
    %223 = vmatpush1.bf16.msra.mxu0 %v104
    %224 = vmatprep.subr.bf16.mxu0 %v97
    %225 = vmatpush1.bf16.msra.mxu0 %v103
    %226 = vmatprep.subr.bf16.mxu0 %v86
    %227 = vmatpush1.bf16.msra.mxu0 %v89
    %228 = vmatprep.subr.bf16.mxu0 %v82
    %229 = vmatpush1.bf16.msra.mxu0 %v88
    %230 = vmatprep.subr.bf16.mxu0 %v71
    %231 = vmatpush1.bf16.msra.mxu0 %v74
    %232 = vmatprep.subr.bf16.mxu0 %v67
    %233 = vmatpush1.bf16.msra.mxu0 %v73
    %234 = vmatprep.subr.bf16.mxu0 %v59
    %235 = vmatpush1.bf16.msra.mxu0 %v58
    %236 = vmatprep.subr.bf16.mxu0 %v57
    %237 = vmatpush1.bf16.msra.mxu0 %v56
    %238 = vmatprep.subr.bf16.mxu0 %v161
    %239 = vmatpush2.bf16.msra.mxu0 %v164
    %240 = vmatprep.subr.bf16.mxu0 %v157
    %241 = vmatpush2.bf16.msra.mxu0 %v163
    %242 = vmatprep.subr.bf16.mxu0 %v146
    %243 = vmatpush2.bf16.msra.mxu0 %v149
    %244 = vmatprep.subr.bf16.mxu0 %v142
    %245 = vmatpush2.bf16.msra.mxu0 %v148
    %246 = vmatprep.subr.bf16.mxu0 %v131
    %247 = vmatpush2.bf16.msra.mxu0 %v134
    %248 = vmatprep.subr.bf16.mxu0 %v127
    %249 = vmatpush2.bf16.msra.mxu0 %v133
    %250 = vmatprep.subr.bf16.mxu0 %v116
    %251 = vmatpush2.bf16.msra.mxu0 %v119
    %252 = vmatprep.subr.bf16.mxu0 %v112
    %253 = vmatpush2.bf16.msra.mxu0 %v118
    %254 = vmatprep.mubr.bf16.mxu0 %v214
    %255 = vmatmul.mubr.bf16.gmra.mxu0 %v213
    %v256 = vpop.f32.mrf.mxu0
    %v257 = vadd.f32 0.0, %v256
    %v258 = vpop.f32.mrf.mxu0
    %v259 = vadd.f32 0.0, %v258
    %v260 = vpop.f32.mrf.mxu0
    %v261 = vadd.f32 0.0, %v260
    %v262 = vpop.f32.mrf.mxu0
    %v263 = vadd.f32 0.0, %v262
    %264 = vdwg.mxu0
    %265 = vmatprep.subr.bf16.mxu0 0
    %266 = vmatpush1.bf16.msra.mxu0 0
    %267 = vmatprep.subr.bf16.mxu0 0
    %268 = vmatpush1.bf16.msra.mxu0 0
    %269 = vmatprep.subr.bf16.mxu0 0
    %270 = vmatpush1.bf16.msra.mxu0 0
    %271 = vmatprep.subr.bf16.mxu0 0
    %272 = vmatpush1.bf16.msra.mxu0 0
    %273 = vmatprep.subr.bf16.mxu0 %v191
    %274 = vmatpush1.bf16.msra.mxu0 %v194
    %275 = vmatprep.subr.bf16.mxu0 %v187
    %276 = vmatpush1.bf16.msra.mxu0 %v193
    %277 = vmatprep.subr.bf16.mxu0 %v176
    %278 = vmatpush1.bf16.msra.mxu0 %v179
    %279 = vmatprep.subr.bf16.mxu0 %v172
    %280 = vmatpush1.bf16.msra.mxu0 %v178
    %281 = vmatprep.subr.bf16.mxu0 0
    %282 = vmatpush2.bf16.msra.mxu0 0
    %283 = vmatprep.subr.bf16.mxu0 0
    %284 = vmatpush2.bf16.msra.mxu0 0
    %285 = vmatprep.subr.bf16.mxu0 0
    %286 = vmatpush2.bf16.msra.mxu0 0
    %287 = vmatprep.subr.bf16.mxu0 0
    %288 = vmatpush2.bf16.msra.mxu0 0
    %289 = vmatprep.subr.bf16.mxu0 0
    %290 = vmatpush2.bf16.msra.mxu0 0
    %291 = vmatprep.subr.bf16.mxu0 0
    %292 = vmatpush2.bf16.msra.mxu0 0
    %293 = vmatprep.subr.bf16.mxu0 0
    %294 = vmatpush2.bf16.msra.mxu0 0
    %295 = vmatprep.subr.bf16.mxu0 0
    %296 = vmatpush2.bf16.msra.mxu0 0
    %297 = vmatprep.mubr.bf16.mxu0 0
    %298 = vmatmul.mubr.bf16.gmra.mxu0 %v220
    %v299 = vpop.f32.mrf.mxu0
    %v300 = vadd.f32 %v257, %v299
    %v301 = vpop.f32.mrf.mxu0
    %v302 = vadd.f32 %v259, %v301
    %v303 = vpop.f32.mrf.mxu0
    %v304 = vadd.f32 %v261, %v303
    %v305 = vpop.f32.mrf.mxu0
    %v306 = vadd.f32 %v263, %v305
    %307 = vdwg.mxu0
    %v308 = vld [vmem:[%s2] sm:$0xff]
    %v309 = vld [vmem:[%s2 + $0x8] sm:$0xff]
    %311 = vset.pattern.permute.xlu0 0
    %312 = vperm.xlu0 %311, %v308
    %v313 = vpop.permute.xlu0 %312
    %316 = vset.pattern.permute.xlu0 0
    %317 = vperm.xlu0 %316, %v309
    %v318 = vpop.permute.xlu0 %317
    %v320 = vmul.f32 %v300, %v313
    %v321 = vmul.f32 %v302, %v313
    %v322 = vmul.f32 %v304, %v318
    %v323 = vmul.f32 %v306, %v318
    %v324 = vld [vmem:[%s3] sm:$0xff]
    %v325 = vld [vmem:[%s3 + $0x8] sm:$0xff]
    %327 = vset.pattern.permute.xlu0 0
    %328 = vperm.xlu0 %327, %v324
    %v329 = vpop.permute.xlu0 %328
    %332 = vset.pattern.permute.xlu0 0
    %333 = vperm.xlu0 %332, %v325
    %v334 = vpop.permute.xlu0 %333
    %v336 = vadd.f32 %v320, %v329
    %v337 = vadd.f32 %v321, %v329
    %v338 = vadd.f32 %v322, %v334
    %v339 = vadd.f32 %v323, %v334
    %v340 = vmax.f32 %v336, 0.0
    %v341 = vmax.f32 %v337, 0.0
    %v342 = vmax.f32 %v338, 0.0
    %v343 = vmax.f32 %v339, 0.0
    %348 = vrot.lane.b32.xlu0 %v340, 127
    %v349 = vpop.permute.xlu0 %348
    %350 = vrot.lane.b32.xlu0 %v341, 127
    %v351 = vpop.permute.xlu0 %350
    %352 = vrot.lane.b32.xlu0 %v342, 127
    %v353 = vpop.permute.xlu0 %352
    %354 = vrot.lane.b32.xlu0 %v343, 127
    %v355 = vpop.permute.xlu0 %354
    %vm356 = vcmask 1039360
    %v357 = vsel %vm356, %v349, %v351
    %v358 = vsel %vm356, %v353, %v355
    %v363 = vmax.f32 %v340, %v357
    %v364 = vmax.f32 %v341, %v351
    %v365 = vmax.f32 %v342, %v358
    %v366 = vmax.f32 %v343, %v355
    %367 = vrot.lane.b32.xlu0 %v340, 126
    %v368 = vpop.permute.xlu0 %367
    %369 = vrot.lane.b32.xlu0 %v341, 126
    %v370 = vpop.permute.xlu0 %369
    %371 = vrot.lane.b32.xlu0 %v342, 126
    %v372 = vpop.permute.xlu0 %371
    %373 = vrot.lane.b32.xlu0 %v343, 126
    %v374 = vpop.permute.xlu0 %373
    %vm375 = vcmask 1031168
    %v376 = vsel %vm375, %v368, %v370
    %v377 = vsel %vm375, %v372, %v374
    %v382 = vmax.f32 %v363, %v376
    %v383 = vmax.f32 %v364, %v370
    %v384 = vmax.f32 %v365, %v377
    %v385 = vmax.f32 %v366, %v374
    %v386 = vpack.c.bf16 %v384, %v382
    %v387 = vpack.c.bf16 %v385, %v383
    %390 = vrot.lane.b32.xlu0 %v386, 127
    %v391 = vpop.permute.xlu0 %390
    %392 = vrot.lane.b32.xlu0 %v387, 127
    %v393 = vpop.permute.xlu0 %392
    %v394 = vsel %vm72, %v391, %v393
    %397 = vrot.lane.b32.xlu0 %v386, 126
    %v398 = vpop.permute.xlu0 %397
    %399 = vrot.lane.b32.xlu0 %v387, 126
    %v400 = vpop.permute.xlu0 %399
    %v401 = vsel %vm87, %v398, %v400
    %404 = vrot.lane.b32.xlu0 %v386, 125
    %v405 = vpop.permute.xlu0 %404
    %406 = vrot.lane.b32.xlu0 %v387, 125
    %v407 = vpop.permute.xlu0 %406
    %v408 = vsel %vm102, %v405, %v407
    %411 = vrot.lane.b32.xlu0 %v386, 124
    %v412 = vpop.permute.xlu0 %411
    %413 = vrot.lane.b32.xlu0 %v387, 124
    %v414 = vpop.permute.xlu0 %413
    %v415 = vsel %vm117, %v412, %v414
    %418 = vrot.lane.b32.xlu0 %v386, 123
    %v419 = vpop.permute.xlu0 %418
    %420 = vrot.lane.b32.xlu0 %v387, 123
    %v421 = vpop.permute.xlu0 %420
    %v422 = vsel %vm132, %v419, %v421
    %425 = vrot.lane.b32.xlu0 %v386, 122
    %v426 = vpop.permute.xlu0 %425
    %427 = vrot.lane.b32.xlu0 %v387, 122
    %v428 = vpop.permute.xlu0 %427
    %v429 = vsel %vm147, %v426, %v428
    %432 = vrot.lane.b32.xlu0 %v386, 121
    %v433 = vpop.permute.xlu0 %432
    %434 = vrot.lane.b32.xlu0 %v387, 121
    %v435 = vpop.permute.xlu0 %434
    %v436 = vsel %vm162, %v433, %v435
    %439 = vrot.lane.b32.xlu0 %v386, 120
    %v440 = vpop.permute.xlu0 %439
    %441 = vrot.lane.b32.xlu0 %v387, 120
    %v442 = vpop.permute.xlu0 %441
    %v443 = vsel %vm177, %v440, %v442
    %446 = vrot.lane.b32.xlu0 %v386, 119
    %v447 = vpop.permute.xlu0 %446
    %448 = vrot.lane.b32.xlu0 %v387, 119
    %v449 = vpop.permute.xlu0 %448
    %v450 = vsel %vm192, %v447, %v449
    %v453 = vld [vmem:[%s4] sm:$0xff]
    %v454 = vld [vmem:[%s4 + $0x8] sm:$0xff]
    %v457 = vunpack.c.l.b16 %v453
    %v458 = vunpack.c.h.b16 %v453
    %v459 = vunpack.c.l.b16 %v454
    %v460 = vunpack.c.h.b16 %v454
    %v461 = vpack.c.b16 %v459, %v457
    %v462 = vpack.c.b16 %v460, %v458
    %vm464 = vcmask 261120
    %v466 = vsel %vm464, %v462, 0
    %468 = vmatprep.subr.bf16.mxu0 %v435
    %469 = vmatpush1.bf16.msra.mxu0 %v436
    %470 = vmatprep.subr.bf16.mxu0 %v428
    %471 = vmatpush1.bf16.msra.mxu0 %v429
    %472 = vmatprep.subr.bf16.mxu0 %v421
    %473 = vmatpush1.bf16.msra.mxu0 %v422
    %474 = vmatprep.subr.bf16.mxu0 %v414
    %475 = vmatpush1.bf16.msra.mxu0 %v415
    %476 = vmatprep.subr.bf16.mxu0 %v407
    %477 = vmatpush1.bf16.msra.mxu0 %v408
    %478 = vmatprep.subr.bf16.mxu0 %v400
    %479 = vmatpush1.bf16.msra.mxu0 %v401
    %480 = vmatprep.subr.bf16.mxu0 %v393
    %481 = vmatpush1.bf16.msra.mxu0 %v394
    %482 = vmatprep.subr.bf16.mxu0 %v387
    %483 = vmatpush1.bf16.msra.mxu0 %v386
    %484 = vmatprep.subr.bf16.mxu0 0
    %485 = vmatpush2.bf16.msra.mxu0 0
    %486 = vmatprep.subr.bf16.mxu0 0
    %487 = vmatpush2.bf16.msra.mxu0 0
    %488 = vmatprep.subr.bf16.mxu0 0
    %489 = vmatpush2.bf16.msra.mxu0 0
    %490 = vmatprep.subr.bf16.mxu0 0
    %491 = vmatpush2.bf16.msra.mxu0 0
    %492 = vmatprep.subr.bf16.mxu0 0
    %493 = vmatpush2.bf16.msra.mxu0 0
    %494 = vmatprep.subr.bf16.mxu0 0
    %495 = vmatpush2.bf16.msra.mxu0 0
    %496 = vmatprep.subr.bf16.mxu0 %v449
    %497 = vmatpush2.bf16.msra.mxu0 %v450
    %498 = vmatprep.subr.bf16.mxu0 %v442
    %499 = vmatpush2.bf16.msra.mxu0 %v443
    %500 = vmatprep.mubr.bf16.mxu0 %v466
    %501 = vmatmul.mubr.bf16.gmra.mxu0 %v461
    %v502 = vpop.f32.mrf.mxu0
    %v503 = vadd.f32 0.0, %v502
    %v504 = vpop.f32.mrf.mxu0
    %v505 = vadd.f32 0.0, %v504
    %v506 = vpop.f32.mrf.mxu0
    %v507 = vadd.f32 0.0, %v506
    %v508 = vpop.f32.mrf.mxu0
    %v509 = vadd.f32 0.0, %v508
    %510 = vdwg.mxu0
    %v511 = vld [vmem:[%s5] sm:$0xff]
    %v512 = vld [vmem:[%s5 + $0x8] sm:$0xff]
    %514 = vset.pattern.permute.xlu0 0
    %515 = vperm.xlu0 %514, %v511
    %v516 = vpop.permute.xlu0 %515
    %519 = vset.pattern.permute.xlu0 0
    %520 = vperm.xlu0 %519, %v512
    %v521 = vpop.permute.xlu0 %520
    %v523 = vmul.f32 %v503, %v516
    %v524 = vmul.f32 %v505, %v516
    %v525 = vmul.f32 %v507, %v521
    %v526 = vmul.f32 %v509, %v521
    %v527 = vld [vmem:[%s6] sm:$0xff]
    %v528 = vld [vmem:[%s6 + $0x8] sm:$0xff]
    %530 = vset.pattern.permute.xlu0 0
    %531 = vperm.xlu0 %530, %v527
    %v532 = vpop.permute.xlu0 %531
    %535 = vset.pattern.permute.xlu0 0
    %536 = vperm.xlu0 %535, %v528
    %v537 = vpop.permute.xlu0 %536
    %v539 = vadd.f32 %v523, %v532
    %v540 = vadd.f32 %v524, %v532
    %v541 = vadd.f32 %v525, %v537
    %v542 = vadd.f32 %v526, %v537
    %v543 = vmax.f32 %v539, 0.0
    %v544 = vmax.f32 %v540, 0.0
    %v545 = vmax.f32 %v541, 0.0
    %v546 = vmax.f32 %v542, 0.0
    %551 = vrot.lane.b32.xlu0 %v543, 127
    %v552 = vpop.permute.xlu0 %551
    %553 = vrot.lane.b32.xlu0 %v544, 127
    %v554 = vpop.permute.xlu0 %553
    %555 = vrot.lane.b32.xlu0 %v545, 127
    %v556 = vpop.permute.xlu0 %555
    %557 = vrot.lane.b32.xlu0 %v546, 127
    %v558 = vpop.permute.xlu0 %557
    %v559 = vsel %vm356, %v552, %v554
    %v560 = vsel %vm356, %v556, %v558
    %v565 = vmax.f32 %v543, %v559
    %v566 = vmax.f32 %v544, %v554
    %v567 = vmax.f32 %v545, %v560
    %v568 = vmax.f32 %v546, %v558
    %569 = vrot.lane.b32.xlu0 %v543, 126
    %v570 = vpop.permute.xlu0 %569
    %571 = vrot.lane.b32.xlu0 %v544, 126
    %v572 = vpop.permute.xlu0 %571
    %573 = vrot.lane.b32.xlu0 %v545, 126
    %v574 = vpop.permute.xlu0 %573
    %575 = vrot.lane.b32.xlu0 %v546, 126
    %v576 = vpop.permute.xlu0 %575
    %v577 = vsel %vm375, %v570, %v572
    %v578 = vsel %vm375, %v574, %v576
    %v583 = vmax.f32 %v565, %v577
    %v584 = vmax.f32 %v566, %v572
    %v585 = vmax.f32 %v567, %v578
    %v586 = vmax.f32 %v568, %v576
    %v588 = vrot.slane %v583, 1
    %589 = vrot.lane.b32.xlu0 %v588, 85
    %v590 = vpop.permute.xlu0 %589
    %v592 = vrot.slane %v583, 2
    %593 = vrot.lane.b32.xlu0 %v592, 42
    %v594 = vpop.permute.xlu0 %593
    %v596 = vrot.slane %v583, 3
    %597 = vrot.lane.b32.xlu0 %v596, 127
    %v598 = vpop.permute.xlu0 %597
    %v600 = vrot.slane %v583, 4
    %601 = vrot.lane.b32.xlu0 %v600, 84
    %v602 = vpop.permute.xlu0 %601
    %v604 = vrot.slane %v583, 5
    %605 = vrot.lane.b32.xlu0 %v604, 41
    %v606 = vpop.permute.xlu0 %605
    %v608 = vrot.slane %v583, 6
    %609 = vrot.lane.b32.xlu0 %v608, 126
    %v610 = vpop.permute.xlu0 %609
    %v612 = vrot.slane %v583, 7
    %613 = vrot.lane.b32.xlu0 %v612, 83
    %v614 = vpop.permute.xlu0 %613
    %617 = vrot.lane.b32.xlu0 %v585, 40
    %v618 = vpop.permute.xlu0 %617
    %v620 = vrot.slane %v585, 1
    %621 = vrot.lane.b32.xlu0 %v620, 125
    %v622 = vpop.permute.xlu0 %621
    %v624 = vrot.slane %v585, 2
    %625 = vrot.lane.b32.xlu0 %v624, 82
    %v626 = vpop.permute.xlu0 %625
    %v628 = vrot.slane %v585, 3
    %629 = vrot.lane.b32.xlu0 %v628, 39
    %v630 = vpop.permute.xlu0 %629
    %v632 = vrot.slane %v585, 4
    %633 = vrot.lane.b32.xlu0 %v632, 124
    %v634 = vpop.permute.xlu0 %633
    %v636 = vrot.slane %v585, 5
    %637 = vrot.lane.b32.xlu0 %v636, 81
    %v638 = vpop.permute.xlu0 %637
    %v640 = vrot.slane %v585, 6
    %641 = vrot.lane.b32.xlu0 %v640, 38
    %v642 = vpop.permute.xlu0 %641
    %v644 = vrot.slane %v585, 7
    %645 = vrot.lane.b32.xlu0 %v644, 123
    %v646 = vpop.permute.xlu0 %645
    %vm648 = vcmask 695296
    %v649 = vsel %vm648, %v583, %v590
    %vm650 = vcmask 343040
    %v651 = vsel %vm650, %v590, %v594
    %v652 = vsel %vm356, %v651, %v598
    %vm653 = vcmask 687104
    %v654 = vsel %vm653, %v598, %v602
    %vm655 = vcmask 334848
    %v656 = vsel %vm655, %v602, %v606
    %v657 = vsel %vm375, %v656, %v610
    %vm658 = vcmask 678912
    %v659 = vsel %vm658, %v610, %v614
    %vm660 = vcmask 326656
    %v661 = vsel %vm660, %v614, %v618
    %vm662 = vcmask 1022976
    %v663 = vsel %vm662, %v661, %v622
    %vm664 = vcmask 670720
    %v665 = vsel %vm664, %v622, %v626
    %vm666 = vcmask 318464
    %v667 = vsel %vm666, %v626, %v630
    %vm668 = vcmask 1014784
    %v669 = vsel %vm668, %v667, %v634
    %vm670 = vcmask 662528
    %v671 = vsel %vm670, %v634, %v638
    %vm672 = vcmask 310272
    %v673 = vsel %vm672, %v638, %v642
    %vm674 = vcmask 1006592
    %v675 = vsel %vm674, %v673, %v646
    %v677 = vrot.slane %v584, 1
    %678 = vrot.lane.b32.xlu0 %v677, 85
    %v679 = vpop.permute.xlu0 %678
    %v681 = vrot.slane %v584, 2
    %682 = vrot.lane.b32.xlu0 %v681, 42
    %v683 = vpop.permute.xlu0 %682
    %v685 = vrot.slane %v584, 3
    %686 = vrot.lane.b32.xlu0 %v685, 127
    %v687 = vpop.permute.xlu0 %686
    %v689 = vrot.slane %v584, 4
    %690 = vrot.lane.b32.xlu0 %v689, 84
    %v691 = vpop.permute.xlu0 %690
    %v693 = vrot.slane %v584, 5
    %694 = vrot.lane.b32.xlu0 %v693, 41
    %v695 = vpop.permute.xlu0 %694
    %v697 = vrot.slane %v584, 6
    %698 = vrot.lane.b32.xlu0 %v697, 126
    %v699 = vpop.permute.xlu0 %698
    %v701 = vrot.slane %v584, 7
    %702 = vrot.lane.b32.xlu0 %v701, 83
    %v703 = vpop.permute.xlu0 %702
    %706 = vrot.lane.b32.xlu0 %v586, 40
    %v707 = vpop.permute.xlu0 %706
    %v709 = vrot.slane %v586, 1
    %710 = vrot.lane.b32.xlu0 %v709, 125
    %v711 = vpop.permute.xlu0 %710
    %v713 = vrot.slane %v586, 2
    %714 = vrot.lane.b32.xlu0 %v713, 82
    %v715 = vpop.permute.xlu0 %714
    %v717 = vrot.slane %v586, 3
    %718 = vrot.lane.b32.xlu0 %v717, 39
    %v719 = vpop.permute.xlu0 %718
    %v721 = vrot.slane %v586, 4
    %722 = vrot.lane.b32.xlu0 %v721, 124
    %v723 = vpop.permute.xlu0 %722
    %v725 = vrot.slane %v586, 5
    %726 = vrot.lane.b32.xlu0 %v725, 81
    %v727 = vpop.permute.xlu0 %726
    %v729 = vrot.slane %v586, 6
    %730 = vrot.lane.b32.xlu0 %v729, 38
    %v731 = vpop.permute.xlu0 %730
    %v733 = vrot.slane %v586, 7
    %734 = vrot.lane.b32.xlu0 %v733, 123
    %v735 = vpop.permute.xlu0 %734
    %v737 = vsel %vm648, %v584, %v679
    %v738 = vsel %vm650, %v679, %v683
    %v739 = vsel %vm356, %v738, %v687
    %v740 = vsel %vm653, %v687, %v691
    %v741 = vsel %vm655, %v691, %v695
    %v742 = vsel %vm375, %v741, %v699
    %v743 = vsel %vm658, %v699, %v703
    %v744 = vsel %vm660, %v703, %v707
    %v745 = vsel %vm662, %v744, %v711
    %v746 = vsel %vm664, %v711, %v715
    %v747 = vsel %vm666, %v715, %v719
    %v748 = vsel %vm668, %v747, %v723
    %v749 = vsel %vm670, %v723, %v727
    %v750 = vsel %vm672, %v727, %v731
    %v751 = vsel %vm674, %v750, %v735
    %v762 = vrot.slane %v737, 7
    %v763 = vrot.slane %v739, 7
    %v764 = vrot.slane %v740, 7
    %v765 = vrot.slane %v742, 7
    %v766 = vrot.slane %v743, 7
    %v767 = vrot.slane %v745, 7
    %v768 = vrot.slane %v746, 7
    %v769 = vrot.slane %v748, 7
    %v770 = vrot.slane %v749, 7
    %v771 = vrot.slane %v751, 7
    %v772 = vrot.slane %v735, 7
    %vm784 = vcmask 1040384
    %v785 = vsel %vm784, %v649, %v762
    %v786 = vsel %vm784, %v652, %v763
    %v787 = vsel %vm784, %v654, %v764
    %v788 = vsel %vm784, %v657, %v765
    %v789 = vsel %vm784, %v659, %v766
    %v790 = vsel %vm784, %v663, %v767
    %v791 = vsel %vm784, %v665, %v768
    %v792 = vsel %vm784, %v669, %v769
    %v793 = vsel %vm784, %v671, %v770
    %v794 = vsel %vm784, %v675, %v771
    %v795 = vsel %vm784, %v646, %v772
    %v796 = vpack.c.bf16 %v785, %v785
    %v797 = vpack.c.bf16 %v786, %v786
    %v798 = vpack.c.bf16 %v787, %v787
    %v799 = vpack.c.bf16 %v788, %v788
    %v800 = vpack.c.bf16 %v789, %v789
    %v801 = vpack.c.bf16 %v790, %v790
    %v802 = vpack.c.bf16 %v791, %v791
    %v803 = vpack.c.bf16 %v792, %v792
    %v804 = vpack.c.bf16 %v793, %v793
    %v805 = vpack.c.bf16 %v794, %v794
    %v806 = vpack.c.bf16 %v795, %v795
    %v807 = vld [vmem:[%s7] sm:$0xff]
    %v808 = vld [vmem:[%s7 + $0x8] sm:$0xff]
    %v809 = vld [vmem:[%s7 + $0x10] sm:$0xff]
    %v810 = vld [vmem:[%s7 + $0x18] sm:$0xff]
    %v811 = vld [vmem:[%s7 + $0x20] sm:$0xff]
    %v812 = vld [vmem:[%s7 + $0x28] sm:$0xff]
    %v813 = vld [vmem:[%s7 + $0x30] sm:$0xff]
    %v814 = vld [vmem:[%s7 + $0x38] sm:$0xff]
    %v815 = vld [vmem:[%s7 + $0x40] sm:$0xff]
    %v816 = vld [vmem:[%s7 + $0x48] sm:$0xff]
    %v817 = vld [vmem:[%s7 + $0x50] sm:$0xff]
    %v818 = vld [vmem:[%s7 + $0x58] sm:$0xff]
    %v819 = vld [vmem:[%s7 + $0x60] sm:$0xff]
    %v820 = vld [vmem:[%s7 + $0x68] sm:$0xff]
    %v821 = vld [vmem:[%s7 + $0x70] sm:$0xff]
    %v822 = vld [vmem:[%s7 + $0x78] sm:$0xff]
    %v823 = vld [vmem:[%s7 + $0x80] sm:$0xff]
    %v824 = vld [vmem:[%s7 + $0x88] sm:$0xff]
    %v825 = vld [vmem:[%s7 + $0x90] sm:$0xff]
    %v826 = vld [vmem:[%s7 + $0x98] sm:$0xff]
    %v827 = vld [vmem:[%s7 + $0xa0] sm:$0xff]
    %v828 = vld [vmem:[%s7 + $0xa8] sm:$0xff]
    %v829 = vld [vmem:[%s7 + $0xb0] sm:$0xff]
    %v830 = vld [vmem:[%s7 + $0xb8] sm:$0xff]
    %v831 = vld [vmem:[%s7 + $0xc0] sm:$0xff]
    %v832 = vld [vmem:[%s7 + $0xc8] sm:$0xff]
    %v833 = vld [vmem:[%s7 + $0xd0] sm:$0xff]
    %v834 = vld [vmem:[%s7 + $0xd8] sm:$0xff]
    %v835 = vld [vmem:[%s7 + $0xe0] sm:$0xff]
    %v836 = vld [vmem:[%s7 + $0xe8] sm:$0xff]
    %v837 = vld [vmem:[%s7 + $0xf0] sm:$0xff]
    %v838 = vld [vmem:[%s7 + $0xf8] sm:$0xff]
    %v839 = vld [vmem:[%s7 + $0x100] sm:$0xff]
    %v840 = vld [vmem:[%s7 + $0x108] sm:$0xff]
    %v841 = vld [vmem:[%s7 + $0x110] sm:$0xff]
    %v842 = vld [vmem:[%s7 + $0x118] sm:$0xff]
    %v843 = vld [vmem:[%s7 + $0x120] sm:$0xff]
    %v844 = vld [vmem:[%s7 + $0x128] sm:$0xff]
    %v845 = vld [vmem:[%s7 + $0x130] sm:$0xff]
    %v846 = vld [vmem:[%s7 + $0x138] sm:$0xff]
    %v847 = vld [vmem:[%s7 + $0x140] sm:$0xff]
    %v848 = vld [vmem:[%s7 + $0x148] sm:$0xff]
    %v849 = vld [vmem:[%s7 + $0x150] sm:$0xff]
    %v850 = vld [vmem:[%s7 + $0x158] sm:$0xff]
    %v851 = vld [vmem:[%s7 + $0x160] sm:$0xff]
    %v852 = vld [vmem:[%s7 + $0x168] sm:$0xff]
    %v853 = vld [vmem:[%s7 + $0x170] sm:$0xff]
    %v854 = vld [vmem:[%s7 + $0x178] sm:$0xff]
    %v855 = vld [vmem:[%s7 + $0x180] sm:$0xff]
    %v856 = vld [vmem:[%s7 + $0x188] sm:$0xff]
    %v857 = vld [vmem:[%s7 + $0x190] sm:$0xff]
    %v858 = vld [vmem:[%s7 + $0x198] sm:$0xff]
    %v859 = vld [vmem:[%s7 + $0x1a0] sm:$0xff]
    %v860 = vld [vmem:[%s7 + $0x1a8] sm:$0xff]
    %v861 = vld [vmem:[%s7 + $0x1b0] sm:$0xff]
    %v862 = vld [vmem:[%s7 + $0x1b8] sm:$0xff]
    %v863 = vld [vmem:[%s7 + $0x1c0] sm:$0xff]
    %v864 = vld [vmem:[%s7 + $0x1c8] sm:$0xff]
    %v865 = vld [vmem:[%s7 + $0x1d0] sm:$0xff]
    %v866 = vld [vmem:[%s7 + $0x1d8] sm:$0xff]
    %v867 = vld [vmem:[%s7 + $0x1e0] sm:$0xff]
    %v868 = vld [vmem:[%s7 + $0x1e8] sm:$0xff]
    %v869 = vld [vmem:[%s7 + $0x1f0] sm:$0xff]
    %v870 = vld [vmem:[%s7 + $0x1f8] sm:$0xff]
    %v871 = vld [vmem:[%s7 + $0x200] sm:$0xff]
    %v872 = vld [vmem:[%s7 + $0x208] sm:$0xff]
    %v873 = vld [vmem:[%s7 + $0x210] sm:$0xff]
    %v874 = vld [vmem:[%s7 + $0x218] sm:$0xff]
    %v875 = vld [vmem:[%s7 + $0x220] sm:$0xff]
    %v876 = vld [vmem:[%s7 + $0x228] sm:$0xff]
    %v877 = vld [vmem:[%s7 + $0x230] sm:$0xff]
    %v878 = vld [vmem:[%s7 + $0x238] sm:$0xff]
    %v879 = vld [vmem:[%s7 + $0x240] sm:$0xff]
    %v880 = vld [vmem:[%s7 + $0x248] sm:$0xff]
    %v881 = vld [vmem:[%s7 + $0x250] sm:$0xff]
    %v882 = vld [vmem:[%s7 + $0x258] sm:$0xff]
    %v883 = vld [vmem:[%s7 + $0x260] sm:$0xff]
    %v884 = vld [vmem:[%s7 + $0x268] sm:$0xff]
    %v885 = vld [vmem:[%s7 + $0x270] sm:$0xff]
    %v886 = vld [vmem:[%s7 + $0x278] sm:$0xff]
    %v887 = vld [vmem:[%s7 + $0x280] sm:$0xff]
    %v888 = vld [vmem:[%s7 + $0x288] sm:$0xff]
    %v889 = vld [vmem:[%s7 + $0x290] sm:$0xff]
    %v890 = vld [vmem:[%s7 + $0x298] sm:$0xff]
    %v891 = vld [vmem:[%s7 + $0x2a0] sm:$0xff]
    %v892 = vld [vmem:[%s7 + $0x2a8] sm:$0xff]
    %v893 = vld [vmem:[%s7 + $0x2b0] sm:$0xff]
    %v894 = vld [vmem:[%s7 + $0x2b8] sm:$0xff]
    %v895 = vld [vmem:[%s7 + $0x2c0] sm:$0xff]
    %v896 = vld [vmem:[%s7 + $0x2c8] sm:$0xff]
    %v897 = vld [vmem:[%s7 + $0x2d0] sm:$0xff]
    %v898 = vld [vmem:[%s7 + $0x2d8] sm:$0xff]
    %v899 = vld [vmem:[%s7 + $0x2e0] sm:$0xff]
    %v900 = vld [vmem:[%s7 + $0x2e8] sm:$0xff]
    %v901 = vld [vmem:[%s7 + $0x2f0] sm:$0xff]
    %v902 = vld [vmem:[%s7 + $0x2f8] sm:$0xff]
    %v903 = vld [vmem:[%s7 + $0x300] sm:$0xff]
    %v904 = vld [vmem:[%s7 + $0x308] sm:$0xff]
    %v905 = vld [vmem:[%s7 + $0x310] sm:$0xff]
    %v906 = vld [vmem:[%s7 + $0x318] sm:$0xff]
    %v907 = vld [vmem:[%s7 + $0x320] sm:$0xff]
    %v908 = vld [vmem:[%s7 + $0x328] sm:$0xff]
    %v909 = vld [vmem:[%s7 + $0x330] sm:$0xff]
    %v910 = vld [vmem:[%s7 + $0x338] sm:$0xff]
    %v911 = vld [vmem:[%s7 + $0x340] sm:$0xff]
    %v912 = vld [vmem:[%s7 + $0x348] sm:$0xff]
    %v913 = vld [vmem:[%s7 + $0x350] sm:$0xff]
    %v914 = vld [vmem:[%s7 + $0x358] sm:$0xff]
    %v915 = vld [vmem:[%s7 + $0x360] sm:$0xff]
    %v916 = vld [vmem:[%s7 + $0x368] sm:$0xff]
    %v917 = vld [vmem:[%s7 + $0x370] sm:$0xff]
    %v918 = vld [vmem:[%s7 + $0x378] sm:$0xff]
    %v919 = vld [vmem:[%s7 + $0x380] sm:$0xff]
    %v920 = vld [vmem:[%s7 + $0x388] sm:$0xff]
    %v921 = vld [vmem:[%s7 + $0x390] sm:$0xff]
    %v922 = vld [vmem:[%s7 + $0x398] sm:$0xff]
    %v923 = vld [vmem:[%s7 + $0x3a0] sm:$0xff]
    %v924 = vld [vmem:[%s7 + $0x3a8] sm:$0xff]
    %v925 = vld [vmem:[%s7 + $0x3b0] sm:$0xff]
    %v926 = vld [vmem:[%s7 + $0x3b8] sm:$0xff]
    %v927 = vld [vmem:[%s7 + $0x3c0] sm:$0xff]
    %v928 = vld [vmem:[%s7 + $0x3c8] sm:$0xff]
    %v929 = vld [vmem:[%s7 + $0x3d0] sm:$0xff]
    %v930 = vld [vmem:[%s7 + $0x3d8] sm:$0xff]
    %v931 = vld [vmem:[%s7 + $0x3e0] sm:$0xff]
    %v932 = vld [vmem:[%s7 + $0x3e8] sm:$0xff]
    %v933 = vld [vmem:[%s7 + $0x3f0] sm:$0xff]
    %v934 = vld [vmem:[%s7 + $0x3f8] sm:$0xff]
    %v935 = vld [vmem:[%s7 + $0x400] sm:$0xff]
    %v936 = vld [vmem:[%s7 + $0x408] sm:$0xff]
    %v937 = vld [vmem:[%s7 + $0x410] sm:$0xff]
    %v938 = vld [vmem:[%s7 + $0x418] sm:$0xff]
    %v939 = vld [vmem:[%s7 + $0x420] sm:$0xff]
    %v940 = vld [vmem:[%s7 + $0x428] sm:$0xff]
    %v941 = vld [vmem:[%s7 + $0x430] sm:$0xff]
    %v942 = vld [vmem:[%s7 + $0x438] sm:$0xff]
    %v943 = vld [vmem:[%s7 + $0x440] sm:$0xff]
    %v944 = vld [vmem:[%s7 + $0x448] sm:$0xff]
    %v945 = vld [vmem:[%s7 + $0x450] sm:$0xff]
    %v946 = vld [vmem:[%s7 + $0x458] sm:$0xff]
    %v947 = vld [vmem:[%s7 + $0x460] sm:$0xff]
    %v948 = vld [vmem:[%s7 + $0x468] sm:$0xff]
    %v949 = vld [vmem:[%s7 + $0x470] sm:$0xff]
    %v950 = vld [vmem:[%s7 + $0x478] sm:$0xff]
    %v951 = vld [vmem:[%s7 + $0x480] sm:$0xff]
    %v952 = vld [vmem:[%s7 + $0x488] sm:$0xff]
    %v953 = vld [vmem:[%s7 + $0x490] sm:$0xff]
    %v954 = vld [vmem:[%s7 + $0x498] sm:$0xff]
    %v955 = vld [vmem:[%s7 + $0x4a0] sm:$0xff]
    %v956 = vld [vmem:[%s7 + $0x4a8] sm:$0xff]
    %v957 = vld [vmem:[%s7 + $0x4b0] sm:$0xff]
    %v958 = vld [vmem:[%s7 + $0x4b8] sm:$0xff]
    %v959 = vld [vmem:[%s7 + $0x4c0] sm:$0xff]
    %v960 = vld [vmem:[%s7 + $0x4c8] sm:$0xff]
    %v961 = vld [vmem:[%s7 + $0x4d0] sm:$0xff]
    %v962 = vld [vmem:[%s7 + $0x4d8] sm:$0xff]
    %v963 = vld [vmem:[%s7 + $0x4e0] sm:$0xff]
    %v964 = vld [vmem:[%s7 + $0x4e8] sm:$0xff]
    %v965 = vld [vmem:[%s7 + $0x4f0] sm:$0xff]
    %v966 = vld [vmem:[%s7 + $0x4f8] sm:$0xff]
    %v967 = vld [vmem:[%s7 + $0x500] sm:$0xff]
    %v968 = vld [vmem:[%s7 + $0x508] sm:$0xff]
    %v969 = vld [vmem:[%s7 + $0x510] sm:$0xff]
    %v970 = vld [vmem:[%s7 + $0x518] sm:$0xff]
    %v971 = vld [vmem:[%s7 + $0x520] sm:$0xff]
    %v972 = vld [vmem:[%s7 + $0x528] sm:$0xff]
    %v973 = vld [vmem:[%s7 + $0x530] sm:$0xff]
    %v974 = vld [vmem:[%s7 + $0x538] sm:$0xff]
    %v975 = vld [vmem:[%s7 + $0x540] sm:$0xff]
    %v976 = vld [vmem:[%s7 + $0x548] sm:$0xff]
    %v977 = vld [vmem:[%s8] sm:$0x3]
    %v979 = vlaneseq
    %v980 = vshrl.u32 %v979, 7
    %v981 = vsub.s32 0, %v980
    %v982 = vrot.slane %v977, %v981
    %v983 = vlaneseq
    %v984 = vshrl.u32 %v983, 7
    %v985 = vsub.s32 1, %v984
    %v986 = vrot.slane %v977, %v985
    %v1159 = vunpack.c.l.b16 %v807
    %v1160 = vunpack.c.h.b16 %v807
    %v1161 = vunpack.c.l.b16 %v808
    %v1162 = vunpack.c.h.b16 %v808
    %v1163 = vunpack.c.l.b16 %v809
    %v1164 = vunpack.c.h.b16 %v809
    %v1165 = vunpack.c.l.b16 %v810
    %v1166 = vunpack.c.h.b16 %v810
    %v1167 = vunpack.c.l.b16 %v811
    %v1168 = vunpack.c.h.b16 %v811
    %v1169 = vunpack.c.l.b16 %v812
    %v1170 = vunpack.c.h.b16 %v812
    %v1171 = vunpack.c.l.b16 %v813
    %v1172 = vunpack.c.h.b16 %v813
    %v1173 = vunpack.c.l.b16 %v814
    %v1174 = vunpack.c.h.b16 %v814
    %v1175 = vunpack.c.l.b16 %v815
    %v1176 = vunpack.c.h.b16 %v815
    %v1177 = vunpack.c.l.b16 %v816
    %v1178 = vunpack.c.h.b16 %v816
    %v1179 = vunpack.c.l.b16 %v817
    %v1180 = vunpack.c.h.b16 %v817
    %v1181 = vunpack.c.l.b16 %v818
    %v1182 = vunpack.c.h.b16 %v818
    %v1183 = vunpack.c.l.b16 %v819
    %v1184 = vunpack.c.h.b16 %v819
    %v1185 = vunpack.c.l.b16 %v820
    %v1186 = vunpack.c.h.b16 %v820
    %v1187 = vunpack.c.l.b16 %v821
    %v1188 = vunpack.c.h.b16 %v821
    %v1189 = vunpack.c.l.b16 %v822
    %v1190 = vunpack.c.h.b16 %v822
    %v1191 = vunpack.c.l.b16 %v823
    %v1192 = vunpack.c.h.b16 %v823
    %v1193 = vunpack.c.l.b16 %v824
    %v1194 = vunpack.c.h.b16 %v824
    %v1195 = vunpack.c.l.b16 %v825
    %v1196 = vunpack.c.h.b16 %v825
    %v1197 = vunpack.c.l.b16 %v826
    %v1198 = vunpack.c.h.b16 %v826
    %v1199 = vunpack.c.l.b16 %v827
    %v1200 = vunpack.c.h.b16 %v827
    %v1201 = vunpack.c.l.b16 %v828
    %v1202 = vunpack.c.h.b16 %v828
    %v1203 = vunpack.c.l.b16 %v829
    %v1204 = vunpack.c.h.b16 %v829
    %v1205 = vunpack.c.l.b16 %v830
    %v1206 = vunpack.c.h.b16 %v830
    %v1207 = vunpack.c.l.b16 %v831
    %v1208 = vunpack.c.h.b16 %v831
    %v1209 = vunpack.c.l.b16 %v832
    %v1210 = vunpack.c.h.b16 %v832
    %v1211 = vunpack.c.l.b16 %v833
    %v1212 = vunpack.c.h.b16 %v833
    %v1213 = vunpack.c.l.b16 %v834
    %v1214 = vunpack.c.h.b16 %v834
    %v1215 = vunpack.c.l.b16 %v835
    %v1216 = vunpack.c.h.b16 %v835
    %v1217 = vunpack.c.l.b16 %v836
    %v1218 = vunpack.c.h.b16 %v836
    %v1219 = vunpack.c.l.b16 %v837
    %v1220 = vunpack.c.h.b16 %v837
    %v1221 = vunpack.c.l.b16 %v838
    %v1222 = vunpack.c.h.b16 %v838
    %v1223 = vunpack.c.l.b16 %v839
    %v1224 = vunpack.c.h.b16 %v839
    %v1225 = vunpack.c.l.b16 %v840
    %v1226 = vunpack.c.h.b16 %v840
    %v1227 = vunpack.c.l.b16 %v841
    %v1228 = vunpack.c.h.b16 %v841
    %v1229 = vunpack.c.l.b16 %v842
    %v1230 = vunpack.c.h.b16 %v842
    %v1231 = vunpack.c.l.b16 %v843
    %v1232 = vunpack.c.h.b16 %v843
    %v1233 = vunpack.c.l.b16 %v844
    %v1234 = vunpack.c.h.b16 %v844
    %v1235 = vunpack.c.l.b16 %v845
    %v1236 = vunpack.c.h.b16 %v845
    %v1237 = vunpack.c.l.b16 %v846
    %v1238 = vunpack.c.h.b16 %v846
    %v1239 = vunpack.c.l.b16 %v847
    %v1240 = vunpack.c.h.b16 %v847
    %v1241 = vunpack.c.l.b16 %v848
    %v1242 = vunpack.c.h.b16 %v848
    %v1243 = vunpack.c.l.b16 %v849
    %v1244 = vunpack.c.h.b16 %v849
    %v1245 = vunpack.c.l.b16 %v850
    %v1246 = vunpack.c.h.b16 %v850
    %v1247 = vunpack.c.l.b16 %v851
    %v1248 = vunpack.c.h.b16 %v851
    %v1249 = vunpack.c.l.b16 %v852
    %v1250 = vunpack.c.h.b16 %v852
    %v1251 = vunpack.c.l.b16 %v853
    %v1252 = vunpack.c.h.b16 %v853
    %v1253 = vunpack.c.l.b16 %v854
    %v1254 = vunpack.c.h.b16 %v854
    %v1255 = vunpack.c.l.b16 %v855
    %v1256 = vunpack.c.h.b16 %v855
    %v1257 = vunpack.c.l.b16 %v856
    %v1258 = vunpack.c.h.b16 %v856
    %v1259 = vunpack.c.l.b16 %v857
    %v1260 = vunpack.c.h.b16 %v857
    %v1261 = vunpack.c.l.b16 %v858
    %v1262 = vunpack.c.h.b16 %v858
    %v1263 = vunpack.c.l.b16 %v859
    %v1264 = vunpack.c.h.b16 %v859
    %v1265 = vunpack.c.l.b16 %v860
    %v1266 = vunpack.c.h.b16 %v860
    %v1267 = vunpack.c.l.b16 %v861
    %v1268 = vunpack.c.h.b16 %v861
    %v1269 = vunpack.c.l.b16 %v862
    %v1270 = vunpack.c.h.b16 %v862
    %v1271 = vunpack.c.l.b16 %v863
    %v1272 = vunpack.c.h.b16 %v863
    %v1273 = vunpack.c.l.b16 %v864
    %v1274 = vunpack.c.h.b16 %v864
    %v1275 = vunpack.c.l.b16 %v865
    %v1276 = vunpack.c.h.b16 %v865
    %v1277 = vunpack.c.l.b16 %v866
    %v1278 = vunpack.c.h.b16 %v866
    %v1279 = vunpack.c.l.b16 %v867
    %v1280 = vunpack.c.h.b16 %v867
    %v1281 = vunpack.c.l.b16 %v868
    %v1282 = vunpack.c.h.b16 %v868
    %v1283 = vunpack.c.l.b16 %v869
    %v1284 = vunpack.c.h.b16 %v869
    %v1285 = vunpack.c.l.b16 %v870
    %v1286 = vunpack.c.h.b16 %v870
    %v1287 = vunpack.c.l.b16 %v871
    %v1288 = vunpack.c.h.b16 %v871
    %v1289 = vunpack.c.l.b16 %v872
    %v1290 = vunpack.c.h.b16 %v872
    %v1291 = vunpack.c.l.b16 %v873
    %v1292 = vunpack.c.h.b16 %v873
    %v1293 = vunpack.c.l.b16 %v874
    %v1294 = vunpack.c.h.b16 %v874
    %v1295 = vunpack.c.l.b16 %v875
    %v1296 = vunpack.c.h.b16 %v875
    %v1297 = vunpack.c.l.b16 %v876
    %v1298 = vunpack.c.h.b16 %v876
    %v1299 = vunpack.c.l.b16 %v877
    %v1300 = vunpack.c.h.b16 %v877
    %v1301 = vunpack.c.l.b16 %v878
    %v1302 = vunpack.c.h.b16 %v878
    %v1303 = vunpack.c.l.b16 %v879
    %v1304 = vunpack.c.h.b16 %v879
    %v1305 = vunpack.c.l.b16 %v880
    %v1306 = vunpack.c.h.b16 %v880
    %v1307 = vunpack.c.l.b16 %v881
    %v1308 = vunpack.c.h.b16 %v881
    %v1309 = vunpack.c.l.b16 %v882
    %v1310 = vunpack.c.h.b16 %v882
    %v1311 = vunpack.c.l.b16 %v883
    %v1312 = vunpack.c.h.b16 %v883
    %v1313 = vunpack.c.l.b16 %v884
    %v1314 = vunpack.c.h.b16 %v884
    %v1315 = vunpack.c.l.b16 %v885
    %v1316 = vunpack.c.h.b16 %v885
    %v1317 = vunpack.c.l.b16 %v886
    %v1318 = vunpack.c.h.b16 %v886
    %v1319 = vunpack.c.l.b16 %v887
    %v1320 = vunpack.c.h.b16 %v887
    %v1321 = vunpack.c.l.b16 %v888
    %v1322 = vunpack.c.h.b16 %v888
    %v1323 = vunpack.c.l.b16 %v889
    %v1324 = vunpack.c.h.b16 %v889
    %v1325 = vunpack.c.l.b16 %v890
    %v1326 = vunpack.c.h.b16 %v890
    %v1327 = vunpack.c.l.b16 %v891
    %v1328 = vunpack.c.h.b16 %v891
    %v1329 = vunpack.c.l.b16 %v892
    %v1330 = vunpack.c.h.b16 %v892
    %v1331 = vunpack.c.l.b16 %v893
    %v1332 = vunpack.c.h.b16 %v893
    %v1333 = vunpack.c.l.b16 %v894
    %v1334 = vunpack.c.h.b16 %v894
    %v1335 = vunpack.c.l.b16 %v895
    %v1336 = vunpack.c.h.b16 %v895
    %v1337 = vunpack.c.l.b16 %v896
    %v1338 = vunpack.c.h.b16 %v896
    %v1339 = vunpack.c.l.b16 %v897
    %v1340 = vunpack.c.h.b16 %v897
    %v1341 = vunpack.c.l.b16 %v898
    %v1342 = vunpack.c.h.b16 %v898
    %v1343 = vunpack.c.l.b16 %v899
    %v1344 = vunpack.c.h.b16 %v899
    %v1345 = vunpack.c.l.b16 %v900
    %v1346 = vunpack.c.h.b16 %v900
    %v1347 = vunpack.c.l.b16 %v901
    %v1348 = vunpack.c.h.b16 %v901
    %v1349 = vunpack.c.l.b16 %v902
    %v1350 = vunpack.c.h.b16 %v902
    %v1351 = vunpack.c.l.b16 %v903
    %v1352 = vunpack.c.h.b16 %v903
    %v1353 = vunpack.c.l.b16 %v904
    %v1354 = vunpack.c.h.b16 %v904
    %v1355 = vunpack.c.l.b16 %v905
    %v1356 = vunpack.c.h.b16 %v905
    %v1357 = vunpack.c.l.b16 %v906
    %v1358 = vunpack.c.h.b16 %v906
    %v1359 = vunpack.c.l.b16 %v907
    %v1360 = vunpack.c.h.b16 %v907
    %v1361 = vunpack.c.l.b16 %v908
    %v1362 = vunpack.c.h.b16 %v908
    %v1363 = vunpack.c.l.b16 %v909
    %v1364 = vunpack.c.h.b16 %v909
    %v1365 = vunpack.c.l.b16 %v910
    %v1366 = vunpack.c.h.b16 %v910
    %v1367 = vunpack.c.l.b16 %v911
    %v1368 = vunpack.c.h.b16 %v911
    %v1369 = vunpack.c.l.b16 %v912
    %v1370 = vunpack.c.h.b16 %v912
    %v1371 = vunpack.c.l.b16 %v913
    %v1372 = vunpack.c.h.b16 %v913
    %v1373 = vunpack.c.l.b16 %v914
    %v1374 = vunpack.c.h.b16 %v914
    %v1375 = vunpack.c.l.b16 %v915
    %v1376 = vunpack.c.h.b16 %v915
    %v1377 = vunpack.c.l.b16 %v916
    %v1378 = vunpack.c.h.b16 %v916
    %v1379 = vunpack.c.l.b16 %v917
    %v1380 = vunpack.c.h.b16 %v917
    %v1381 = vunpack.c.l.b16 %v918
    %v1382 = vunpack.c.h.b16 %v918
    %v1383 = vunpack.c.l.b16 %v919
    %v1384 = vunpack.c.h.b16 %v919
    %v1385 = vunpack.c.l.b16 %v920
    %v1386 = vunpack.c.h.b16 %v920
    %v1387 = vunpack.c.l.b16 %v921
    %v1388 = vunpack.c.h.b16 %v921
    %v1389 = vunpack.c.l.b16 %v922
    %v1390 = vunpack.c.h.b16 %v922
    %v1391 = vunpack.c.l.b16 %v923
    %v1392 = vunpack.c.h.b16 %v923
    %v1393 = vunpack.c.l.b16 %v924
    %v1394 = vunpack.c.h.b16 %v924
    %v1395 = vunpack.c.l.b16 %v925
    %v1396 = vunpack.c.h.b16 %v925
    %v1397 = vunpack.c.l.b16 %v926
    %v1398 = vunpack.c.h.b16 %v926
    %v1399 = vunpack.c.l.b16 %v927
    %v1400 = vunpack.c.h.b16 %v927
    %v1401 = vunpack.c.l.b16 %v928
    %v1402 = vunpack.c.h.b16 %v928
    %v1403 = vunpack.c.l.b16 %v929
    %v1404 = vunpack.c.h.b16 %v929
    %v1405 = vunpack.c.l.b16 %v930
    %v1406 = vunpack.c.h.b16 %v930
    %v1407 = vunpack.c.l.b16 %v931
    %v1408 = vunpack.c.h.b16 %v931
    %v1409 = vunpack.c.l.b16 %v932
    %v1410 = vunpack.c.h.b16 %v932
    %v1411 = vunpack.c.l.b16 %v933
    %v1412 = vunpack.c.h.b16 %v933
    %v1413 = vunpack.c.l.b16 %v934
    %v1414 = vunpack.c.h.b16 %v934
    %v1415 = vunpack.c.l.b16 %v935
    %v1416 = vunpack.c.h.b16 %v935
    %v1417 = vunpack.c.l.b16 %v936
    %v1418 = vunpack.c.h.b16 %v936
    %v1419 = vunpack.c.l.b16 %v937
    %v1420 = vunpack.c.h.b16 %v937
    %v1421 = vunpack.c.l.b16 %v938
    %v1422 = vunpack.c.h.b16 %v938
    %v1423 = vunpack.c.l.b16 %v939
    %v1424 = vunpack.c.h.b16 %v939
    %v1425 = vunpack.c.l.b16 %v940
    %v1426 = vunpack.c.h.b16 %v940
    %v1427 = vunpack.c.l.b16 %v941
    %v1428 = vunpack.c.h.b16 %v941
    %v1429 = vunpack.c.l.b16 %v942
    %v1430 = vunpack.c.h.b16 %v942
    %v1431 = vunpack.c.l.b16 %v943
    %v1432 = vunpack.c.h.b16 %v943
    %v1433 = vunpack.c.l.b16 %v944
    %v1434 = vunpack.c.h.b16 %v944
    %v1435 = vunpack.c.l.b16 %v945
    %v1436 = vunpack.c.h.b16 %v945
    %v1437 = vunpack.c.l.b16 %v946
    %v1438 = vunpack.c.h.b16 %v946
    %v1439 = vunpack.c.l.b16 %v947
    %v1440 = vunpack.c.h.b16 %v947
    %v1441 = vunpack.c.l.b16 %v948
    %v1442 = vunpack.c.h.b16 %v948
    %v1443 = vunpack.c.l.b16 %v949
    %v1444 = vunpack.c.h.b16 %v949
    %v1445 = vunpack.c.l.b16 %v950
    %v1446 = vunpack.c.h.b16 %v950
    %v1447 = vunpack.c.l.b16 %v951
    %v1448 = vunpack.c.h.b16 %v951
    %v1449 = vunpack.c.l.b16 %v952
    %v1450 = vunpack.c.h.b16 %v952
    %v1451 = vunpack.c.l.b16 %v953
    %v1452 = vunpack.c.h.b16 %v953
    %v1453 = vunpack.c.l.b16 %v954
    %v1454 = vunpack.c.h.b16 %v954
    %v1455 = vunpack.c.l.b16 %v955
    %v1456 = vunpack.c.h.b16 %v955
    %v1457 = vunpack.c.l.b16 %v956
    %v1458 = vunpack.c.h.b16 %v956
    %v1459 = vunpack.c.l.b16 %v957
    %v1460 = vunpack.c.h.b16 %v957
    %v1461 = vunpack.c.l.b16 %v958
    %v1462 = vunpack.c.h.b16 %v958
    %v1463 = vunpack.c.l.b16 %v959
    %v1464 = vunpack.c.h.b16 %v959
    %v1465 = vunpack.c.l.b16 %v960
    %v1466 = vunpack.c.h.b16 %v960
    %v1467 = vunpack.c.l.b16 %v961
    %v1468 = vunpack.c.h.b16 %v961
    %v1469 = vunpack.c.l.b16 %v962
    %v1470 = vunpack.c.h.b16 %v962
    %v1471 = vunpack.c.l.b16 %v963
    %v1472 = vunpack.c.h.b16 %v963
    %v1473 = vunpack.c.l.b16 %v964
    %v1474 = vunpack.c.h.b16 %v964
    %v1475 = vunpack.c.l.b16 %v965
    %v1476 = vunpack.c.h.b16 %v965
    %v1477 = vunpack.c.l.b16 %v966
    %v1478 = vunpack.c.h.b16 %v966
    %v1479 = vunpack.c.l.b16 %v967
    %v1480 = vunpack.c.h.b16 %v967
    %v1481 = vunpack.c.l.b16 %v968
    %v1482 = vunpack.c.h.b16 %v968
    %v1483 = vunpack.c.l.b16 %v969
    %v1484 = vunpack.c.h.b16 %v969
    %v1485 = vunpack.c.l.b16 %v970
    %v1486 = vunpack.c.h.b16 %v970
    %v1487 = vunpack.c.l.b16 %v971
    %v1488 = vunpack.c.h.b16 %v971
    %v1489 = vunpack.c.l.b16 %v972
    %v1490 = vunpack.c.h.b16 %v972
    %v1491 = vunpack.c.l.b16 %v973
    %v1492 = vunpack.c.h.b16 %v973
    %v1493 = vunpack.c.l.b16 %v974
    %v1494 = vunpack.c.h.b16 %v974
    %v1495 = vunpack.c.l.b16 %v975
    %v1496 = vunpack.c.h.b16 %v975
    %v1497 = vunpack.c.l.b16 %v976
    %v1498 = vunpack.c.h.b16 %v976
    %v1499 = vpack.c.b16 %v1161, %v1159
    %v1500 = vpack.c.b16 %v1162, %v1160
    %v1501 = vpack.c.b16 %v1165, %v1163
    %v1502 = vpack.c.b16 %v1166, %v1164
    %v1503 = vpack.c.b16 %v1169, %v1167
    %v1504 = vpack.c.b16 %v1170, %v1168
    %v1505 = vpack.c.b16 %v1173, %v1171
    %v1506 = vpack.c.b16 %v1174, %v1172
    %v1507 = vpack.c.b16 %v1177, %v1175
    %v1508 = vpack.c.b16 %v1178, %v1176
    %v1509 = vpack.c.b16 %v1181, %v1179
    %v1510 = vpack.c.b16 %v1182, %v1180
    %v1511 = vpack.c.b16 %v1185, %v1183
    %v1512 = vpack.c.b16 %v1186, %v1184
    %v1513 = vpack.c.b16 %v1189, %v1187
    %v1514 = vpack.c.b16 %v1190, %v1188
    %v1515 = vpack.c.b16 %v1193, %v1191
    %v1516 = vpack.c.b16 %v1194, %v1192
    %v1517 = vpack.c.b16 %v1197, %v1195
    %v1518 = vpack.c.b16 %v1198, %v1196
    %v1519 = vpack.c.b16 %v1201, %v1199
    %v1520 = vpack.c.b16 %v1202, %v1200
    %v1521 = vpack.c.b16 %v1205, %v1203
    %v1522 = vpack.c.b16 %v1206, %v1204
    %v1523 = vpack.c.b16 %v1209, %v1207
    %v1524 = vpack.c.b16 %v1210, %v1208
    %v1525 = vpack.c.b16 %v1213, %v1211
    %v1526 = vpack.c.b16 %v1214, %v1212
    %v1527 = vpack.c.b16 %v1217, %v1215
    %v1528 = vpack.c.b16 %v1218, %v1216
    %v1529 = vpack.c.b16 %v1221, %v1219
    %v1530 = vpack.c.b16 %v1222, %v1220
    %v1531 = vpack.c.b16 %v1225, %v1223
    %v1532 = vpack.c.b16 %v1226, %v1224
    %v1533 = vpack.c.b16 %v1229, %v1227
    %v1534 = vpack.c.b16 %v1230, %v1228
    %v1535 = vpack.c.b16 %v1233, %v1231
    %v1536 = vpack.c.b16 %v1234, %v1232
    %v1537 = vpack.c.b16 %v1237, %v1235
    %v1538 = vpack.c.b16 %v1238, %v1236
    %v1539 = vpack.c.b16 %v1241, %v1239
    %v1540 = vpack.c.b16 %v1242, %v1240
    %v1541 = vpack.c.b16 %v1245, %v1243
    %v1542 = vpack.c.b16 %v1246, %v1244
    %v1543 = vpack.c.b16 %v1249, %v1247
    %v1544 = vpack.c.b16 %v1250, %v1248
    %v1545 = vpack.c.b16 %v1253, %v1251
    %v1546 = vpack.c.b16 %v1254, %v1252
    %v1547 = vpack.c.b16 %v1257, %v1255
    %v1548 = vpack.c.b16 %v1258, %v1256
    %v1549 = vpack.c.b16 %v1261, %v1259
    %v1550 = vpack.c.b16 %v1262, %v1260
    %v1551 = vpack.c.b16 %v1265, %v1263
    %v1552 = vpack.c.b16 %v1266, %v1264
    %v1553 = vpack.c.b16 %v1269, %v1267
    %v1554 = vpack.c.b16 %v1270, %v1268
    %v1555 = vpack.c.b16 %v1273, %v1271
    %v1556 = vpack.c.b16 %v1274, %v1272
    %v1557 = vpack.c.b16 %v1277, %v1275
    %v1558 = vpack.c.b16 %v1278, %v1276
    %v1559 = vpack.c.b16 %v1281, %v1279
    %v1560 = vpack.c.b16 %v1282, %v1280
    %v1561 = vpack.c.b16 %v1285, %v1283
    %v1562 = vpack.c.b16 %v1286, %v1284
    %v1563 = vpack.c.b16 %v1289, %v1287
    %v1564 = vpack.c.b16 %v1290, %v1288
    %v1565 = vpack.c.b16 %v1293, %v1291
    %v1566 = vpack.c.b16 %v1294, %v1292
    %v1567 = vpack.c.b16 %v1297, %v1295
    %v1568 = vpack.c.b16 %v1298, %v1296
    %v1569 = vpack.c.b16 %v1301, %v1299
    %v1570 = vpack.c.b16 %v1302, %v1300
    %v1571 = vpack.c.b16 %v1305, %v1303
    %v1572 = vpack.c.b16 %v1306, %v1304
    %v1573 = vpack.c.b16 %v1309, %v1307
    %v1574 = vpack.c.b16 %v1310, %v1308
    %v1575 = vpack.c.b16 %v1313, %v1311
    %v1576 = vpack.c.b16 %v1314, %v1312
    %v1577 = vpack.c.b16 %v1317, %v1315
    %v1578 = vpack.c.b16 %v1318, %v1316
    %v1579 = vpack.c.b16 %v1321, %v1319
    %v1580 = vpack.c.b16 %v1322, %v1320
    %v1581 = vpack.c.b16 %v1325, %v1323
    %v1582 = vpack.c.b16 %v1326, %v1324
    %v1583 = vpack.c.b16 %v1329, %v1327
    %v1584 = vpack.c.b16 %v1330, %v1328
    %v1585 = vpack.c.b16 %v1333, %v1331
    %v1586 = vpack.c.b16 %v1334, %v1332
    %v1587 = vpack.c.b16 %v1337, %v1335
    %v1588 = vpack.c.b16 %v1338, %v1336
    %v1589 = vpack.c.b16 %v1341, %v1339
    %v1590 = vpack.c.b16 %v1342, %v1340
    %v1591 = vpack.c.b16 %v1345, %v1343
    %v1592 = vpack.c.b16 %v1346, %v1344
    %v1593 = vpack.c.b16 %v1349, %v1347
    %v1594 = vpack.c.b16 %v1350, %v1348
    %v1595 = vpack.c.b16 %v1353, %v1351
    %v1596 = vpack.c.b16 %v1354, %v1352
    %v1597 = vpack.c.b16 %v1357, %v1355
    %v1598 = vpack.c.b16 %v1358, %v1356
    %v1599 = vpack.c.b16 %v1361, %v1359
    %v1600 = vpack.c.b16 %v1362, %v1360
    %v1601 = vpack.c.b16 %v1365, %v1363
    %v1602 = vpack.c.b16 %v1366, %v1364
    %v1603 = vpack.c.b16 %v1369, %v1367
    %v1604 = vpack.c.b16 %v1370, %v1368
    %v1605 = vpack.c.b16 %v1373, %v1371
    %v1606 = vpack.c.b16 %v1374, %v1372
    %v1607 = vpack.c.b16 %v1377, %v1375
    %v1608 = vpack.c.b16 %v1378, %v1376
    %v1609 = vpack.c.b16 %v1381, %v1379
    %v1610 = vpack.c.b16 %v1382, %v1380
    %v1611 = vpack.c.b16 %v1385, %v1383
    %v1612 = vpack.c.b16 %v1386, %v1384
    %v1613 = vpack.c.b16 %v1389, %v1387
    %v1614 = vpack.c.b16 %v1390, %v1388
    %v1615 = vpack.c.b16 %v1393, %v1391
    %v1616 = vpack.c.b16 %v1394, %v1392
    %v1617 = vpack.c.b16 %v1397, %v1395
    %v1618 = vpack.c.b16 %v1398, %v1396
    %v1619 = vpack.c.b16 %v1401, %v1399
    %v1620 = vpack.c.b16 %v1402, %v1400
    %v1621 = vpack.c.b16 %v1405, %v1403
    %v1622 = vpack.c.b16 %v1406, %v1404
    %v1623 = vpack.c.b16 %v1409, %v1407
    %v1624 = vpack.c.b16 %v1410, %v1408
    %v1625 = vpack.c.b16 %v1413, %v1411
    %v1626 = vpack.c.b16 %v1414, %v1412
    %v1627 = vpack.c.b16 %v1417, %v1415
    %v1628 = vpack.c.b16 %v1418, %v1416
    %v1629 = vpack.c.b16 %v1421, %v1419
    %v1630 = vpack.c.b16 %v1422, %v1420
    %v1631 = vpack.c.b16 %v1425, %v1423
    %v1632 = vpack.c.b16 %v1426, %v1424
    %v1633 = vpack.c.b16 %v1429, %v1427
    %v1634 = vpack.c.b16 %v1430, %v1428
    %v1635 = vpack.c.b16 %v1433, %v1431
    %v1636 = vpack.c.b16 %v1434, %v1432
    %v1637 = vpack.c.b16 %v1437, %v1435
    %v1638 = vpack.c.b16 %v1438, %v1436
    %v1639 = vpack.c.b16 %v1441, %v1439
    %v1640 = vpack.c.b16 %v1442, %v1440
    %v1641 = vpack.c.b16 %v1445, %v1443
    %v1642 = vpack.c.b16 %v1446, %v1444
    %v1643 = vpack.c.b16 %v1449, %v1447
    %v1644 = vpack.c.b16 %v1450, %v1448
    %v1645 = vpack.c.b16 %v1453, %v1451
    %v1646 = vpack.c.b16 %v1454, %v1452
    %v1647 = vpack.c.b16 %v1457, %v1455
    %v1648 = vpack.c.b16 %v1458, %v1456
    %v1649 = vpack.c.b16 %v1461, %v1459
    %v1650 = vpack.c.b16 %v1462, %v1460
    %v1651 = vpack.c.b16 %v1465, %v1463
    %v1652 = vpack.c.b16 %v1466, %v1464
    %v1653 = vpack.c.b16 %v1469, %v1467
    %v1654 = vpack.c.b16 %v1470, %v1468
    %v1655 = vpack.c.b16 %v1473, %v1471
    %v1656 = vpack.c.b16 %v1474, %v1472
    %v1657 = vpack.c.b16 %v1477, %v1475
    %v1658 = vpack.c.b16 %v1478, %v1476
    %v1659 = vpack.c.b16 %v1481, %v1479
    %v1660 = vpack.c.b16 %v1482, %v1480
    %v1661 = vpack.c.b16 %v1485, %v1483
    %v1662 = vpack.c.b16 %v1486, %v1484
    %v1663 = vpack.c.b16 %v1489, %v1487
    %v1664 = vpack.c.b16 %v1490, %v1488
    %v1665 = vpack.c.b16 %v1493, %v1491
    %v1666 = vpack.c.b16 %v1494, %v1492
    %v1667 = vpack.c.b16 %v1497, %v1495
    %v1668 = vpack.c.b16 %v1498, %v1496
    %vm1839 = vcmask 654336
    %v1841 = vsel %vm1839, %v806, 0
    %1843 = vmatprep.subr.bf16.mxu0 %v1514
    %1844 = vmatpush1.bf16.msra.mxu0 %v1513
    %1845 = vmatprep.subr.bf16.mxu0 %v1512
    %1846 = vmatpush1.bf16.msra.mxu0 %v1511
    %1847 = vmatprep.subr.bf16.mxu0 %v1510
    %1848 = vmatpush1.bf16.msra.mxu0 %v1509
    %1849 = vmatprep.subr.bf16.mxu0 %v1508
    %1850 = vmatpush1.bf16.msra.mxu0 %v1507
    %1851 = vmatprep.subr.bf16.mxu0 %v1506
    %1852 = vmatpush1.bf16.msra.mxu0 %v1505
    %1853 = vmatprep.subr.bf16.mxu0 %v1504
    %1854 = vmatpush1.bf16.msra.mxu0 %v1503
    %1855 = vmatprep.subr.bf16.mxu0 %v1502
    %1856 = vmatpush1.bf16.msra.mxu0 %v1501
    %1857 = vmatprep.subr.bf16.mxu0 %v1500
    %1858 = vmatpush1.bf16.msra.mxu0 %v1499
    %1859 = vmatprep.subr.bf16.mxu0 %v1530
    %1860 = vmatpush2.bf16.msra.mxu0 %v1529
    %1861 = vmatprep.subr.bf16.mxu0 %v1528
    %1862 = vmatpush2.bf16.msra.mxu0 %v1527
    %1863 = vmatprep.subr.bf16.mxu0 %v1526
    %1864 = vmatpush2.bf16.msra.mxu0 %v1525
    %1865 = vmatprep.subr.bf16.mxu0 %v1524
    %1866 = vmatpush2.bf16.msra.mxu0 %v1523
    %1867 = vmatprep.subr.bf16.mxu0 %v1522
    %1868 = vmatpush2.bf16.msra.mxu0 %v1521
    %1869 = vmatprep.subr.bf16.mxu0 %v1520
    %1870 = vmatpush2.bf16.msra.mxu0 %v1519
    %1871 = vmatprep.subr.bf16.mxu0 %v1518
    %1872 = vmatpush2.bf16.msra.mxu0 %v1517
    %1873 = vmatprep.subr.bf16.mxu0 %v1516
    %1874 = vmatpush2.bf16.msra.mxu0 %v1515
    %1875 = vmatprep.mubr.bf16.mxu0 %v797
    %1876 = vmatmul.mubr.bf16.gmra.mxu0 %v796
    %v1877 = vpop.f32.mrf.mxu0
    %v1878 = vadd.f32 %v982, %v1877
    %v1879 = vpop.f32.mrf.mxu0
    %v1880 = vadd.f32 %v986, %v1879
    %v1881 = vpop.f32.mrf.mxu0
    %v1882 = vpop.f32.mrf.mxu0
    %1883 = vdwg.mxu0
    %1884 = vmatprep.subr.bf16.mxu0 %v1546
    %1885 = vmatpush1.bf16.msra.mxu0 %v1545
    %1886 = vmatprep.subr.bf16.mxu0 %v1544
    %1887 = vmatpush1.bf16.msra.mxu0 %v1543
    %1888 = vmatprep.subr.bf16.mxu0 %v1542
    %1889 = vmatpush1.bf16.msra.mxu0 %v1541
    %1890 = vmatprep.subr.bf16.mxu0 %v1540
    %1891 = vmatpush1.bf16.msra.mxu0 %v1539
    %1892 = vmatprep.subr.bf16.mxu0 %v1538
    %1893 = vmatpush1.bf16.msra.mxu0 %v1537
    %1894 = vmatprep.subr.bf16.mxu0 %v1536
    %1895 = vmatpush1.bf16.msra.mxu0 %v1535
    %1896 = vmatprep.subr.bf16.mxu0 %v1534
    %1897 = vmatpush1.bf16.msra.mxu0 %v1533
    %1898 = vmatprep.subr.bf16.mxu0 %v1532
    %1899 = vmatpush1.bf16.msra.mxu0 %v1531
    %1900 = vmatprep.subr.bf16.mxu0 %v1562
    %1901 = vmatpush2.bf16.msra.mxu0 %v1561
    %1902 = vmatprep.subr.bf16.mxu0 %v1560
    %1903 = vmatpush2.bf16.msra.mxu0 %v1559
    %1904 = vmatprep.subr.bf16.mxu0 %v1558
    %1905 = vmatpush2.bf16.msra.mxu0 %v1557
    %1906 = vmatprep.subr.bf16.mxu0 %v1556
    %1907 = vmatpush2.bf16.msra.mxu0 %v1555
    %1908 = vmatprep.subr.bf16.mxu0 %v1554
    %1909 = vmatpush2.bf16.msra.mxu0 %v1553
    %1910 = vmatprep.subr.bf16.mxu0 %v1552
    %1911 = vmatpush2.bf16.msra.mxu0 %v1551
    %1912 = vmatprep.subr.bf16.mxu0 %v1550
    %1913 = vmatpush2.bf16.msra.mxu0 %v1549
    %1914 = vmatprep.subr.bf16.mxu0 %v1548
    %1915 = vmatpush2.bf16.msra.mxu0 %v1547
    %1916 = vmatprep.mubr.bf16.mxu0 %v799
    %1917 = vmatmul.mubr.bf16.gmra.mxu0 %v798
    %v1918 = vpop.f32.mrf.mxu0
    %v1919 = vadd.f32 %v1878, %v1918
    %v1920 = vpop.f32.mrf.mxu0
    %v1921 = vadd.f32 %v1880, %v1920
    %v1922 = vpop.f32.mrf.mxu0
    %v1923 = vpop.f32.mrf.mxu0
    %1924 = vdwg.mxu0
    %1925 = vmatprep.subr.bf16.mxu0 %v1578
    %1926 = vmatpush1.bf16.msra.mxu0 %v1577
    %1927 = vmatprep.subr.bf16.mxu0 %v1576
    %1928 = vmatpush1.bf16.msra.mxu0 %v1575
    %1929 = vmatprep.subr.bf16.mxu0 %v1574
    %1930 = vmatpush1.bf16.msra.mxu0 %v1573
    %1931 = vmatprep.subr.bf16.mxu0 %v1572
    %1932 = vmatpush1.bf16.msra.mxu0 %v1571
    %1933 = vmatprep.subr.bf16.mxu0 %v1570
    %1934 = vmatpush1.bf16.msra.mxu0 %v1569
    %1935 = vmatprep.subr.bf16.mxu0 %v1568
    %1936 = vmatpush1.bf16.msra.mxu0 %v1567
    %1937 = vmatprep.subr.bf16.mxu0 %v1566
    %1938 = vmatpush1.bf16.msra.mxu0 %v1565
    %1939 = vmatprep.subr.bf16.mxu0 %v1564
    %1940 = vmatpush1.bf16.msra.mxu0 %v1563
    %1941 = vmatprep.subr.bf16.mxu0 %v1594
    %1942 = vmatpush2.bf16.msra.mxu0 %v1593
    %1943 = vmatprep.subr.bf16.mxu0 %v1592
    %1944 = vmatpush2.bf16.msra.mxu0 %v1591
    %1945 = vmatprep.subr.bf16.mxu0 %v1590
    %1946 = vmatpush2.bf16.msra.mxu0 %v1589
    %1947 = vmatprep.subr.bf16.mxu0 %v1588
    %1948 = vmatpush2.bf16.msra.mxu0 %v1587
    %1949 = vmatprep.subr.bf16.mxu0 %v1586
    %1950 = vmatpush2.bf16.msra.mxu0 %v1585
    %1951 = vmatprep.subr.bf16.mxu0 %v1584
    %1952 = vmatpush2.bf16.msra.mxu0 %v1583
    %1953 = vmatprep.subr.bf16.mxu0 %v1582
    %1954 = vmatpush2.bf16.msra.mxu0 %v1581
    %1955 = vmatprep.subr.bf16.mxu0 %v1580
    %1956 = vmatpush2.bf16.msra.mxu0 %v1579
    %1957 = vmatprep.mubr.bf16.mxu0 %v801
    %1958 = vmatmul.mubr.bf16.gmra.mxu0 %v800
    %v1959 = vpop.f32.mrf.mxu0
    %v1960 = vadd.f32 %v1919, %v1959
    %v1961 = vpop.f32.mrf.mxu0
    %v1962 = vadd.f32 %v1921, %v1961
    %v1963 = vpop.f32.mrf.mxu0
    %v1964 = vpop.f32.mrf.mxu0
    %1965 = vdwg.mxu0
    %1966 = vmatprep.subr.bf16.mxu0 %v1610
    %1967 = vmatpush1.bf16.msra.mxu0 %v1609
    %1968 = vmatprep.subr.bf16.mxu0 %v1608
    %1969 = vmatpush1.bf16.msra.mxu0 %v1607
    %1970 = vmatprep.subr.bf16.mxu0 %v1606
    %1971 = vmatpush1.bf16.msra.mxu0 %v1605
    %1972 = vmatprep.subr.bf16.mxu0 %v1604
    %1973 = vmatpush1.bf16.msra.mxu0 %v1603
    %1974 = vmatprep.subr.bf16.mxu0 %v1602
    %1975 = vmatpush1.bf16.msra.mxu0 %v1601
    %1976 = vmatprep.subr.bf16.mxu0 %v1600
    %1977 = vmatpush1.bf16.msra.mxu0 %v1599
    %1978 = vmatprep.subr.bf16.mxu0 %v1598
    %1979 = vmatpush1.bf16.msra.mxu0 %v1597
    %1980 = vmatprep.subr.bf16.mxu0 %v1596
    %1981 = vmatpush1.bf16.msra.mxu0 %v1595
    %1982 = vmatprep.subr.bf16.mxu0 %v1626
    %1983 = vmatpush2.bf16.msra.mxu0 %v1625
    %1984 = vmatprep.subr.bf16.mxu0 %v1624
    %1985 = vmatpush2.bf16.msra.mxu0 %v1623
    %1986 = vmatprep.subr.bf16.mxu0 %v1622
    %1987 = vmatpush2.bf16.msra.mxu0 %v1621
    %1988 = vmatprep.subr.bf16.mxu0 %v1620
    %1989 = vmatpush2.bf16.msra.mxu0 %v1619
    %1990 = vmatprep.subr.bf16.mxu0 %v1618
    %1991 = vmatpush2.bf16.msra.mxu0 %v1617
    %1992 = vmatprep.subr.bf16.mxu0 %v1616
    %1993 = vmatpush2.bf16.msra.mxu0 %v1615
    %1994 = vmatprep.subr.bf16.mxu0 %v1614
    %1995 = vmatpush2.bf16.msra.mxu0 %v1613
    %1996 = vmatprep.subr.bf16.mxu0 %v1612
    %1997 = vmatpush2.bf16.msra.mxu0 %v1611
    %1998 = vmatprep.mubr.bf16.mxu0 %v803
    %1999 = vmatmul.mubr.bf16.gmra.mxu0 %v802
    %v2000 = vpop.f32.mrf.mxu0
    %v2001 = vadd.f32 %v1960, %v2000
    %v2002 = vpop.f32.mrf.mxu0
    %v2003 = vadd.f32 %v1962, %v2002
    %v2004 = vpop.f32.mrf.mxu0
    %v2005 = vpop.f32.mrf.mxu0
    %2006 = vdwg.mxu0
    %2007 = vmatprep.subr.bf16.mxu0 %v1642
    %2008 = vmatpush1.bf16.msra.mxu0 %v1641
    %2009 = vmatprep.subr.bf16.mxu0 %v1640
    %2010 = vmatpush1.bf16.msra.mxu0 %v1639
    %2011 = vmatprep.subr.bf16.mxu0 %v1638
    %2012 = vmatpush1.bf16.msra.mxu0 %v1637
    %2013 = vmatprep.subr.bf16.mxu0 %v1636
    %2014 = vmatpush1.bf16.msra.mxu0 %v1635
    %2015 = vmatprep.subr.bf16.mxu0 %v1634
    %2016 = vmatpush1.bf16.msra.mxu0 %v1633
    %2017 = vmatprep.subr.bf16.mxu0 %v1632
    %2018 = vmatpush1.bf16.msra.mxu0 %v1631
    %2019 = vmatprep.subr.bf16.mxu0 %v1630
    %2020 = vmatpush1.bf16.msra.mxu0 %v1629
    %2021 = vmatprep.subr.bf16.mxu0 %v1628
    %2022 = vmatpush1.bf16.msra.mxu0 %v1627
    %2023 = vmatprep.subr.bf16.mxu0 %v1658
    %2024 = vmatpush2.bf16.msra.mxu0 %v1657
    %2025 = vmatprep.subr.bf16.mxu0 %v1656
    %2026 = vmatpush2.bf16.msra.mxu0 %v1655
    %2027 = vmatprep.subr.bf16.mxu0 %v1654
    %2028 = vmatpush2.bf16.msra.mxu0 %v1653
    %2029 = vmatprep.subr.bf16.mxu0 %v1652
    %2030 = vmatpush2.bf16.msra.mxu0 %v1651
    %2031 = vmatprep.subr.bf16.mxu0 %v1650
    %2032 = vmatpush2.bf16.msra.mxu0 %v1649
    %2033 = vmatprep.subr.bf16.mxu0 %v1648
    %2034 = vmatpush2.bf16.msra.mxu0 %v1647
    %2035 = vmatprep.subr.bf16.mxu0 %v1646
    %2036 = vmatpush2.bf16.msra.mxu0 %v1645
    %2037 = vmatprep.subr.bf16.mxu0 %v1644
    %2038 = vmatpush2.bf16.msra.mxu0 %v1643
    %2039 = vmatprep.mubr.bf16.mxu0 %v805
    %2040 = vmatmul.mubr.bf16.gmra.mxu0 %v804
    %v2041 = vpop.f32.mrf.mxu0
    %v2042 = vadd.f32 %v2001, %v2041
    %v2043 = vpop.f32.mrf.mxu0
    %v2044 = vadd.f32 %v2003, %v2043
    %v2045 = vpop.f32.mrf.mxu0
    %v2046 = vpop.f32.mrf.mxu0
    %2047 = vdwg.mxu0
    %2048 = vmatprep.subr.bf16.mxu0 0
    %2049 = vmatpush1.bf16.msra.mxu0 0
    %2050 = vmatprep.subr.bf16.mxu0 0
    %2051 = vmatpush1.bf16.msra.mxu0 0
    %2052 = vmatprep.subr.bf16.mxu0 0
    %2053 = vmatpush1.bf16.msra.mxu0 0
    %2054 = vmatprep.subr.bf16.mxu0 %v1668
    %2055 = vmatpush1.bf16.msra.mxu0 %v1667
    %2056 = vmatprep.subr.bf16.mxu0 %v1666
    %2057 = vmatpush1.bf16.msra.mxu0 %v1665
    %2058 = vmatprep.subr.bf16.mxu0 %v1664
    %2059 = vmatpush1.bf16.msra.mxu0 %v1663
    %2060 = vmatprep.subr.bf16.mxu0 %v1662
    %2061 = vmatpush1.bf16.msra.mxu0 %v1661
    %2062 = vmatprep.subr.bf16.mxu0 %v1660
    %2063 = vmatpush1.bf16.msra.mxu0 %v1659
    %2064 = vmatprep.subr.bf16.mxu0 0
    %2065 = vmatpush2.bf16.msra.mxu0 0
    %2066 = vmatprep.subr.bf16.mxu0 0
    %2067 = vmatpush2.bf16.msra.mxu0 0
    %2068 = vmatprep.subr.bf16.mxu0 0
    %2069 = vmatpush2.bf16.msra.mxu0 0
    %2070 = vmatprep.subr.bf16.mxu0 0
    %2071 = vmatpush2.bf16.msra.mxu0 0
    %2072 = vmatprep.subr.bf16.mxu0 0
    %2073 = vmatpush2.bf16.msra.mxu0 0
    %2074 = vmatprep.subr.bf16.mxu0 0
    %2075 = vmatpush2.bf16.msra.mxu0 0
    %2076 = vmatprep.subr.bf16.mxu0 0
    %2077 = vmatpush2.bf16.msra.mxu0 0
    %2078 = vmatprep.subr.bf16.mxu0 0
    %2079 = vmatpush2.bf16.msra.mxu0 0
    %2080 = vmatprep.mubr.bf16.mxu0 0
    %2081 = vmatmul.mubr.bf16.gmra.mxu0 %v1841
    %v2082 = vpop.f32.mrf.mxu0
    %v2083 = vadd.f32 %v2042, %v2082
    %v2084 = vpop.f32.mrf.mxu0
    %v2085 = vadd.f32 %v2044, %v2084
    %v2086 = vpop.f32.mrf.mxu0
    %v2087 = vpop.f32.mrf.mxu0
    %2088 = vdwg.mxu0
    %v2089 = vmax.f32 %v2083, 0.0
    %v2090 = vmax.f32 %v2085, 0.0
    %v2091 = vpack.c.bf16 %v2089, %v2089
    %v2092 = vpack.c.bf16 %v2090, %v2090
    %v2093 = vld [vmem:[%s9] sm:$0xf]
    %v2094 = vld [vmem:[%s9 + $0x4] sm:$0xf]
    %v2095 = vld [vmem:[%s9 + $0x8] sm:$0xf]
    %v2096 = vld [vmem:[%s9 + $0xc] sm:$0xf]
    %v2097 = vld [vmem:[%s9 + $0x10] sm:$0xf]
    %v2098 = vld [vmem:[%s9 + $0x14] sm:$0xf]
    %v2099 = vld [vmem:[%s9 + $0x18] sm:$0xf]
    %v2100 = vld [vmem:[%s9 + $0x1c] sm:$0xf]
    %v2101 = vld [vmem:[%s9 + $0x20] sm:$0xf]
    %v2102 = vld [vmem:[%s9 + $0x24] sm:$0xf]
    %v2103 = vld [vmem:[%s9 + $0x28] sm:$0xf]
    %v2104 = vld [vmem:[%s9 + $0x2c] sm:$0xf]
    %v2105 = vld [vmem:[%s9 + $0x30] sm:$0xf]
    %v2106 = vld [vmem:[%s9 + $0x34] sm:$0xf]
    %v2107 = vld [vmem:[%s9 + $0x38] sm:$0xf]
    %v2108 = vld [vmem:[%s9 + $0x3c] sm:$0xf]
    %v2109 = vld [vmem:[%s9 + $0x40] sm:$0xf]
    %v2110 = vld [vmem:[%s9 + $0x44] sm:$0xf]
    %v2111 = vld [vmem:[%s9 + $0x48] sm:$0xf]
    %v2112 = vld [vmem:[%s9 + $0x4c] sm:$0xf]
    %v2113 = vld [vmem:[%s9 + $0x50] sm:$0xf]
    %v2114 = vld [vmem:[%s9 + $0x54] sm:$0xf]
    %v2115 = vld [vmem:[%s9 + $0x58] sm:$0xf]
    %v2116 = vld [vmem:[%s9 + $0x5c] sm:$0xf]
    %v2117 = vld [vmem:[%s9 + $0x60] sm:$0xf]
    %v2118 = vld [vmem:[%s10] sm:$0x1]
    %v2120 = vlaneseq
    %v2121 = vshrl.u32 %v2120, 7
    %v2122 = vsub.s32 0, %v2121
    %v2123 = vrot.slane %v2118, %v2122
    %v2150 = vunpack.c.l.b16 %v2093
    %v2151 = vunpack.c.l.b16 %v2094
    %v2152 = vunpack.c.l.b16 %v2095
    %v2153 = vunpack.c.l.b16 %v2096
    %v2154 = vunpack.c.l.b16 %v2097
    %v2155 = vunpack.c.l.b16 %v2098
    %v2156 = vunpack.c.l.b16 %v2099
    %v2157 = vunpack.c.l.b16 %v2100
    %v2158 = vunpack.c.l.b16 %v2101
    %v2159 = vunpack.c.l.b16 %v2102
    %v2160 = vunpack.c.l.b16 %v2103
    %v2161 = vunpack.c.l.b16 %v2104
    %v2162 = vunpack.c.l.b16 %v2105
    %v2163 = vunpack.c.l.b16 %v2106
    %v2164 = vunpack.c.l.b16 %v2107
    %v2165 = vunpack.c.l.b16 %v2108
    %v2166 = vunpack.c.l.b16 %v2109
    %v2167 = vunpack.c.l.b16 %v2110
    %v2168 = vunpack.c.l.b16 %v2111
    %v2169 = vunpack.c.l.b16 %v2112
    %v2170 = vunpack.c.l.b16 %v2113
    %v2171 = vunpack.c.l.b16 %v2114
    %v2172 = vunpack.c.l.b16 %v2115
    %v2173 = vunpack.c.l.b16 %v2116
    %v2174 = vunpack.c.l.b16 %v2117
    %v2175 = vpack.c.b16 %v2151, %v2150
    %v2176 = vpack.c.b16 %v2153, %v2152
    %v2177 = vpack.c.b16 %v2155, %v2154
    %v2178 = vpack.c.b16 %v2157, %v2156
    %v2179 = vpack.c.b16 %v2159, %v2158
    %v2180 = vpack.c.b16 %v2161, %v2160
    %v2181 = vpack.c.b16 %v2163, %v2162
    %v2182 = vpack.c.b16 %v2165, %v2164
    %v2183 = vpack.c.b16 %v2167, %v2166
    %v2184 = vpack.c.b16 %v2169, %v2168
    %v2185 = vpack.c.b16 %v2171, %v2170
    %v2186 = vpack.c.b16 %v2173, %v2172
    %v2187 = vpack.c.b16 %v2174, %v2174
    %vm2200 = vcmask 588800
    %v2202 = vsel %vm2200, %v2092, 0
    %vm2204 = vcmask 1043456
    %v2206 = vsel %vm2204, %v2187, 0
    %2208 = vmatprep.subr.bf16.mxu0 0
    %2209 = vmatpush1.bf16.msra.mxu0 %v2182
    %2210 = vmatprep.subr.bf16.mxu0 0
    %2211 = vmatpush1.bf16.msra.mxu0 %v2181
    %2212 = vmatprep.subr.bf16.mxu0 0
    %2213 = vmatpush1.bf16.msra.mxu0 %v2180
    %2214 = vmatprep.subr.bf16.mxu0 0
    %2215 = vmatpush1.bf16.msra.mxu0 %v2179
    %2216 = vmatprep.subr.bf16.mxu0 0
    %2217 = vmatpush1.bf16.msra.mxu0 %v2178
    %2218 = vmatprep.subr.bf16.mxu0 0
    %2219 = vmatpush1.bf16.msra.mxu0 %v2177
    %2220 = vmatprep.subr.bf16.mxu0 0
    %2221 = vmatpush1.bf16.msra.mxu0 %v2176
    %2222 = vmatprep.subr.bf16.mxu0 0
    %2223 = vmatpush1.bf16.msra.mxu0 %v2175
    %2224 = vmatprep.subr.bf16.mxu0 0
    %2225 = vmatpush2.bf16.msra.mxu0 0
    %2226 = vmatprep.subr.bf16.mxu0 0
    %2227 = vmatpush2.bf16.msra.mxu0 0
    %2228 = vmatprep.subr.bf16.mxu0 0
    %2229 = vmatpush2.bf16.msra.mxu0 0
    %2230 = vmatprep.subr.bf16.mxu0 0
    %2231 = vmatpush2.bf16.msra.mxu0 %v2206
    %2232 = vmatprep.subr.bf16.mxu0 0
    %2233 = vmatpush2.bf16.msra.mxu0 %v2186
    %2234 = vmatprep.subr.bf16.mxu0 0
    %2235 = vmatpush2.bf16.msra.mxu0 %v2185
    %2236 = vmatprep.subr.bf16.mxu0 0
    %2237 = vmatpush2.bf16.msra.mxu0 %v2184
    %2238 = vmatprep.subr.bf16.mxu0 0
    %2239 = vmatpush2.bf16.msra.mxu0 %v2183
    %2240 = vmatprep.mubr.bf16.mxu0 %v2202
    %2241 = vmatmul.mubr.bf16.gmra.mxu0 %v2091
    %v2242 = vpop.f32.mrf.mxu0
    %v2243 = vadd.f32 %v2123, %v2242
    %v2244 = vpop.f32.mrf.mxu0
    %v2245 = vpop.f32.mrf.mxu0
    %v2246 = vpop.f32.mrf.mxu0
    %2247 = vdwg.mxu0
    %v2248 = vxor.u32 %v2243, 2147483648
    %v2249 = vmul.f32 %v2248, 1.442695
    %v2250 = vpow.pop %v2249
    %v2251 = vadd.f32 %v2250, 1.0
    %v2252 = vrcp.pop %v2251
    %v2253 = vmul.f32 1.0, %v2252
    %vm2254 = vcmask 1041408
    %v2255 = vsel %vm2254, %v2253, 0.0
    %2256 = vst [vmem:[#allocation2] sm:$0xff] %v2255
    // Predicated region
    $region46: #{tpu_custom_call.1} parent=1 // pred_check
      _
    $region47: #{tpu_custom_call.1} parent=1 // pred_check_branch
      %2258 = sbr.rel (0) target = $region49
    $region48: #{tpu_custom_call.1} parent=1 // pred_region
      %s2260 = ssub.s32 128, 128
      %2261 = vsyncadd [#allocation3], %s2260
      %s2263 = sshll.u32 [#allocation2], 4
      %s2264 = int_to_ptr.vmem [resolvable:$true] %s2263
      %2266 = dma.vmem_to_hbm [thread:$0]  %s2264, 128, %s11, [#allocation3]
    $region49: #{tpu_custom_call.1} parent=1 // pred_fallthru
      _
    // Predicated region
    $region50: #{tpu_custom_call.1} parent=1 // pred_check
      _
    $region51: #{tpu_custom_call.1} parent=1 // pred_check_branch
      %2268 = sbr.rel (0) target = $region53
    $region52: #{tpu_custom_call.1} parent=1 // pred_region
      %2269 = dma.done [#allocation3], 128
    $region53: #{tpu_custom_call.1} parent=1 // pred_fallthru
      _
    %2270 = vsyncpa [#allocation3], 1

</llo_original>
